<compile_context>
chip_gen: v6e
topology: v6e:2x2x1
jax: 0.10.0
libtpu: 0.0.40
codegen_flags: <defaults>
</compile_context>

<pallas_src>
import functools

import jax
import jax.numpy as jnp
from jax.experimental import pallas as pl
from jax.experimental.pallas import tpu as pltpu


def _improvement_kernel(x_ref, scale_ref, shift_ref, w_ref, b_ref, o_ref,
                        *, dilation):
    """Per-batch-element kernel.

    x_ref    : (H, W, Cin)         input slab (NHWC, one batch element), f32
    scale_ref: (1, 1, Cin)         folded BatchNorm scale = gamma / sqrt(var + eps)
    shift_ref: (1, 1, Cin)         folded BatchNorm shift = beta - mean * scale
    w_ref    : (3, 3*Cin, Cout)    sign-binarized conv weights, bf16,
                                   K laid out kx-major ([kx*Cin + c])
    b_ref    : (1, Cout)           conv bias, f32
    o_ref    : (H, W, Cin)         output slab, f32
    """
    H, W, Cin = x_ref.shape
    Cout = w_ref.shape[-1]
    d = dilation

    xv = x_ref[...]                                      # residual (f32)

    # --- BatchNorm2d (eval mode, folded per-channel affine) + sign binarize ---
    # bitorch Sign maps 0 -> +1; result cast straight to bf16 (exact for +/-1),
    # so all following data movement runs on packed bf16 vregs.
    a = xv * scale_ref[...] + shift_ref[...]
    a_sign = jnp.where(a >= 0.0, 1.0, -1.0).astype(jnp.bfloat16)

    # --- zero-pad H (cheap, untiled leading axis) and W, as a value ----------
    zc = jnp.zeros((H, d, Cin), jnp.bfloat16)
    zr = jnp.zeros((d, W + 2 * d, Cin), jnp.bfloat16)
    padded = jnp.concatenate(
        [zr, jnp.concatenate([zc, a_sign, zc], axis=1), zr], axis=0
    )                                                    # (H+2d, W+2d, Cin) bf16

    # --- hoist the 3 kx-shifted column windows once and fuse them along K ----
    # (3 misaligned sublane slices total instead of 9; K grows to 3*Cin)
    wide = jnp.concatenate(
        [padded[:, kx * d:kx * d + W, :] for kx in range(3)], axis=-1
    )                                                    # (H+2d, W, 3*Cin) bf16

    # --- 3 dilated row taps as 3 MXU matmuls, bias folded into the init ------
    acc = jnp.broadcast_to(b_ref[...], (H * W, Cout))    # f32 accumulator
    for ky in range(3):
        patch = wide[ky * d:ky * d + H]                  # cheap leading-axis slice
        acc = acc + jnp.dot(patch.reshape(H * W, 3 * Cin), w_ref[ky],
                            preferred_element_type=jnp.float32)
    y = acc.reshape(H, W, Cout)

    # --- residual / sliced addition, single full-width store -----------------
    if Cin == Cout:
        o_ref[...] = xv + y
    else:
        # first `split` residual channels pass through; conv output is
        # zero-extended over them so one unmasked full store suffices.
        split = Cin - Cout
        y_full = jnp.concatenate(
            [jnp.zeros((H, W, split), jnp.float32), y], axis=-1)
        o_ref[...] = xv + y_full


def improvement_block_forward(x_nchw, params, dilation):
    """Wrapper: NCHW in/out (PyTorch convention); the Pallas kernel runs in NHWC."""
    N, Cin, H, W = x_nchw.shape
    w = params["w"]                                      # (Cout, Cin, 3, 3)
    Cout = w.shape[0]
    eps = params["eps"]

    # Fold BatchNorm, binarize weights, pack K kx-major (parameter setup = glue).
    scale = params["gamma"] / jnp.sqrt(params["var"] + eps)
    shift = params["beta"] - params["mean"] * scale
    w_bin = jnp.where(w >= 0.0, 1.0, -1.0)
    # (Cout, Cin, ky, kx) -> (ky, kx, Cin, Cout) -> (3, 3*Cin, Cout), bf16 (+/-1 exact)
    w_k = jnp.transpose(w_bin, (2, 3, 1, 0)).reshape(3, 3 * Cin, Cout)
    w_k = w_k.astype(jnp.bfloat16)

    x_nhwc = jnp.transpose(x_nchw, (0, 2, 3, 1)).astype(jnp.float32)
    scale3 = scale.reshape(1, 1, Cin).astype(jnp.float32)
    shift3 = shift.reshape(1, 1, Cin).astype(jnp.float32)
    b2 = params["b"].reshape(1, Cout).astype(jnp.float32)

    kernel = functools.partial(_improvement_kernel, dilation=dilation)
    out_nhwc = pl.pallas_call(
        kernel,
        out_shape=jax.ShapeDtypeStruct((N, H, W, Cin), jnp.float32),
        grid=(N,),
        in_specs=[
            pl.BlockSpec((None, H, W, Cin), lambda n: (n, 0, 0, 0)),
            pl.BlockSpec((1, 1, Cin), lambda n: (0, 0, 0)),
            pl.BlockSpec((1, 1, Cin), lambda n: (0, 0, 0)),
            pl.BlockSpec((3, 3 * Cin, Cout), lambda n: (0, 0, 0)),
            pl.BlockSpec((1, Cout), lambda n: (0, 0)),
        ],
        out_specs=pl.BlockSpec((None, H, W, Cin), lambda n: (n, 0, 0, 0)),
        compiler_params=pltpu.CompilerParams(
            dimension_semantics=("parallel",)),          # batch is independent
    )(x_nhwc, scale3, shift3, w_k, b2)

    return jnp.transpose(out_nhwc, (0, 3, 1, 2))         # back to NCHW


def init_params(key, channels, in_channels):
    """Deterministic synthetic parameters (shapes per ImprovementBlock.__init__)."""
    k1, k2, k3, k4, k5, k6 = jax.random.split(key, 6)
    return {
        "gamma": jax.random.uniform(k1, (in_channels,), jnp.float32, 0.5, 1.5),
        "beta": 0.1 * jax.random.normal(k2, (in_channels,), jnp.float32),
        "mean": 0.1 * jax.random.normal(k3, (in_channels,), jnp.float32),
        "var": jax.random.uniform(k4, (in_channels,), jnp.float32, 0.5, 1.5),
        "eps": 1e-5,
        "w": 0.1 * jax.random.normal(k5, (channels, in_channels, 3, 3), jnp.float32),
        "b": 0.1 * jax.random.normal(k6, (channels,), jnp.float32),
    }


def reference_forward(x_nchw, params, dilation, channels, in_channels):
    """Pure-JAX reference of the PyTorch forward (eval-mode BN, binary conv)."""
    scale = params["gamma"] / jnp.sqrt(params["var"] + params["eps"])
    shift = params["beta"] - params["mean"] * scale
    a = x_nchw * scale[None, :, None, None] + shift[None, :, None, None]
    a_bin = jnp.where(a >= 0.0, 1.0, -1.0)
    w_bin = jnp.where(params["w"] >= 0.0, 1.0, -1.0)
    y = jax.lax.conv_general_dilated(
        a_bin, w_bin, window_strides=(1, 1),
        padding=[(dilation, dilation), (dilation, dilation)],
        rhs_dilation=(dilation, dilation),
        dimension_numbers=("NCHW", "OIHW", "NCHW"))
    y = y + params["b"][None, :, None, None]
    if channels == in_channels:
        return x_nchw + y
    keep = x_nchw[:, :in_channels - channels]
    added = x_nchw[:, in_channels - channels:] + y
    return jnp.concatenate([keep, added], axis=1)


if __name__ == "__main__":
    key = jax.random.PRNGKey(0)
    configs = [
        # (channels, in_channels, dilation) — sliced-addition path
        (8, 16, 1),
        # channels == in_channels — plain residual-add path (also tests dilation=2)
        (16, 16, 2),
    ]
    N, H, W = 2, 16, 16
    ok = True
    for channels, in_channels, dilation in configs:
        key, kx, kp = jax.random.split(key, 3)
        x = jax.random.normal(kx, (N, in_channels, H, W), jnp.float32)
        params = init_params(kp, channels, in_channels)

        out = improvement_block_forward(x, params, dilation)
        out = jax.block_until_ready(out)

        ref = reference_forward(x, params, dilation, channels, in_channels)
        if out.shape != (N, in_channels, H, W):
            ok = False
        if not jnp.allclose(out, ref, atol=1e-4, rtol=1e-4):
            ok = False

    if ok:
        print("KERNEL_OK")
    else:
        print("KERNEL_MISMATCH")
</pallas_src>

<mosaic_0001>
module attributes {stable_mosaic.version = 11 : i64} {
  func.func @_improvement_kernel(%arg0: i32, %arg1: memref<1x16x16x16xf32, #tpu.memory_space<vmem>>, %arg2: memref<1x1x16xf32, #tpu.memory_space<vmem>>, %arg3: memref<1x1x16xf32, #tpu.memory_space<vmem>>, %arg4: memref<3x48x8xbf16, #tpu.memory_space<vmem>>, %arg5: memref<1x8xf32, #tpu.memory_space<vmem>>, %arg6: memref<1x16x16x16xf32, #tpu.memory_space<vmem>>) attributes {dimension_semantics = [#tpu.dimension_semantics<parallel>], iteration_bounds = array<i64: 2>, scalar_prefetch = 0 : i64, scratch_operands = 0 : i64, tpu.core_type = #tpu.core_type<tc>, window_params = [{transform_indices = @transform_0, window_bounds = array<i64: 1, 16, 16, 16>}, {pipeline_mode = #tpu.pipeline_mode<synchronous>, transform_indices = @transform_1, window_bounds = array<i64: 1, 1, 16>}, {pipeline_mode = #tpu.pipeline_mode<synchronous>, transform_indices = @transform_2, window_bounds = array<i64: 1, 1, 16>}, {pipeline_mode = #tpu.pipeline_mode<synchronous>, transform_indices = @transform_3, window_bounds = array<i64: 3, 48, 8>}, {pipeline_mode = #tpu.pipeline_mode<synchronous>, transform_indices = @transform_4, window_bounds = array<i64: 1, 8>}, {transform_indices = @transform_5, window_bounds = array<i64: 1, 16, 16, 16>}]} {
    %c0 = arith.constant 0 : index
    %c0_0 = arith.constant 0 : index
    %c0_1 = arith.constant 0 : index
    %c0_2 = arith.constant 0 : index
    %0 = vector.load %arg1[%c0, %c0_0, %c0_1, %c0_2] : memref<1x16x16x16xf32, #tpu.memory_space<vmem>>, vector<1x16x16x16xf32>
    %1 = vector.shape_cast %0 : vector<1x16x16x16xf32> to vector<16x16x16xf32>
    %c0_3 = arith.constant 0 : index
    %c0_4 = arith.constant 0 : index
    %c0_5 = arith.constant 0 : index
    %2 = vector.load %arg2[%c0_3, %c0_4, %c0_5] : memref<1x1x16xf32, #tpu.memory_space<vmem>>, vector<1x1x16xf32>
    %3 = vector.broadcast %2 : vector<1x1x16xf32> to vector<16x16x16xf32>
    %4 = arith.mulf %1, %3 : vector<16x16x16xf32>
    %c0_6 = arith.constant 0 : index
    %c0_7 = arith.constant 0 : index
    %c0_8 = arith.constant 0 : index
    %5 = vector.load %arg3[%c0_6, %c0_7, %c0_8] : memref<1x1x16xf32, #tpu.memory_space<vmem>>, vector<1x1x16xf32>
    %6 = vector.broadcast %5 : vector<1x1x16xf32> to vector<16x16x16xf32>
    %7 = arith.addf %4, %6 : vector<16x16x16xf32>
    %cst = arith.constant 0.000000e+00 : f32
    %8 = vector.broadcast %cst : f32 to vector<16x16x16xf32>
    %9 = arith.cmpf oge, %7, %8 : vector<16x16x16xf32>
    %cst_9 = arith.constant 1.000000e+00 : f32
    %cst_10 = arith.constant -1.000000e+00 : f32
    %10 = vector.broadcast %cst_9 : f32 to vector<16x16x16xf32>
    %11 = vector.broadcast %cst_10 : f32 to vector<16x16x16xf32>
    %12 = arith.select %9, %10, %11 : vector<16x16x16xi1>, vector<16x16x16xf32>
    %13 = arith.truncf %12 : vector<16x16x16xf32> to vector<16x16x16xbf16>
    %cst_11 = arith.constant 0.000000e+00 : bf16
    %14 = vector.broadcast %cst_11 : bf16 to vector<16x1x16xbf16>
    %cst_12 = arith.constant 0.000000e+00 : bf16
    %15 = vector.broadcast %cst_12 : bf16 to vector<1x18x16xbf16>
    %16 = tpu.concatenate %14, %13, %14 in 1 : vector<16x1x16xbf16>, vector<16x16x16xbf16>, vector<16x1x16xbf16> -> vector<16x18x16xbf16>
    %17 = tpu.concatenate %15, %16, %15 in 0 : vector<1x18x16xbf16>, vector<16x18x16xbf16>, vector<1x18x16xbf16> -> vector<18x18x16xbf16>
    %18 = vector.extract_strided_slice %17 {offsets = [0, 0, 0], sizes = [18, 16, 16], strides = [1, 1, 1]} : vector<18x18x16xbf16> to vector<18x16x16xbf16>
    %19 = vector.extract_strided_slice %17 {offsets = [0, 1, 0], sizes = [18, 16, 16], strides = [1, 1, 1]} : vector<18x18x16xbf16> to vector<18x16x16xbf16>
    %20 = vector.extract_strided_slice %17 {offsets = [0, 2, 0], sizes = [18, 16, 16], strides = [1, 1, 1]} : vector<18x18x16xbf16> to vector<18x16x16xbf16>
    %21 = tpu.concatenate %18, %19, %20 in 2 : vector<18x16x16xbf16>, vector<18x16x16xbf16>, vector<18x16x16xbf16> -> vector<18x16x48xbf16>
    %c0_13 = arith.constant 0 : index
    %c0_14 = arith.constant 0 : index
    %22 = vector.load %arg5[%c0_13, %c0_14] : memref<1x8xf32, #tpu.memory_space<vmem>>, vector<1x8xf32>
    %23 = vector.shape_cast %22 : vector<1x8xf32> to vector<1x8xf32>
    %24 = vector.broadcast %23 : vector<1x8xf32> to vector<256x8xf32>
    %25 = vector.extract_strided_slice %21 {offsets = [0, 0, 0], sizes = [16, 16, 48], strides = [1, 1, 1]} : vector<18x16x48xbf16> to vector<16x16x48xbf16>
    %26 = vector.shape_cast %25 : vector<16x16x48xbf16> to vector<256x48xbf16>
    %c0_15 = arith.constant 0 : index
    %c0_16 = arith.constant 0 : index
    %c0_17 = arith.constant 0 : index
    %27 = vector.load %arg4[%c0_15, %c0_16, %c0_17] : memref<3x48x8xbf16, #tpu.memory_space<vmem>>, vector<1x48x8xbf16>
    %28 = vector.shape_cast %27 : vector<1x48x8xbf16> to vector<48x8xbf16>
    %cst_18 = arith.constant dense<0.000000e+00> : vector<256x8xf32>
    %29 = tpu.matmul %26, %28, %cst_18 {dimension_numbers = #tpu.dot_dimension_numbers<[1], [0], [0], [1], [0, 0, 1, 1], [], []>} : vector<256x48xbf16>, vector<48x8xbf16>, vector<256x8xf32> -> vector<256x8xf32>
    %30 = arith.addf %24, %29 : vector<256x8xf32>
    %31 = vector.extract_strided_slice %21 {offsets = [1, 0, 0], sizes = [16, 16, 48], strides = [1, 1, 1]} : vector<18x16x48xbf16> to vector<16x16x48xbf16>
    %32 = vector.shape_cast %31 : vector<16x16x48xbf16> to vector<256x48xbf16>
    %c1 = arith.constant 1 : index
    %c0_19 = arith.constant 0 : index
    %c0_20 = arith.constant 0 : index
    %33 = vector.load %arg4[%c1, %c0_19, %c0_20] : memref<3x48x8xbf16, #tpu.memory_space<vmem>>, vector<1x48x8xbf16>
    %34 = vector.shape_cast %33 : vector<1x48x8xbf16> to vector<48x8xbf16>
    %cst_21 = arith.constant dense<0.000000e+00> : vector<256x8xf32>
    %35 = tpu.matmul %32, %34, %cst_21 {dimension_numbers = #tpu.dot_dimension_numbers<[1], [0], [0], [1], [0, 0, 1, 1], [], []>} : vector<256x48xbf16>, vector<48x8xbf16>, vector<256x8xf32> -> vector<256x8xf32>
    %36 = arith.addf %30, %35 : vector<256x8xf32>
    %37 = vector.extract_strided_slice %21 {offsets = [2, 0, 0], sizes = [16, 16, 48], strides = [1, 1, 1]} : vector<18x16x48xbf16> to vector<16x16x48xbf16>
    %38 = vector.shape_cast %37 : vector<16x16x48xbf16> to vector<256x48xbf16>
    %c2 = arith.constant 2 : index
    %c0_22 = arith.constant 0 : index
    %c0_23 = arith.constant 0 : index
    %39 = vector.load %arg4[%c2, %c0_22, %c0_23] : memref<3x48x8xbf16, #tpu.memory_space<vmem>>, vector<1x48x8xbf16>
    %40 = vector.shape_cast %39 : vector<1x48x8xbf16> to vector<48x8xbf16>
    %cst_24 = arith.constant dense<0.000000e+00> : vector<256x8xf32>
    %41 = tpu.matmul %38, %40, %cst_24 {dimension_numbers = #tpu.dot_dimension_numbers<[1], [0], [0], [1], [0, 0, 1, 1], [], []>} : vector<256x48xbf16>, vector<48x8xbf16>, vector<256x8xf32> -> vector<256x8xf32>
    %42 = arith.addf %36, %41 : vector<256x8xf32>
    %43 = vector.shape_cast %42 : vector<256x8xf32> to vector<16x16x8xf32>
    %cst_25 = arith.constant 0.000000e+00 : f32
    %44 = vector.broadcast %cst_25 : f32 to vector<16x16x8xf32>
    %45 = tpu.concatenate %44, %43 in 2 : vector<16x16x8xf32>, vector<16x16x8xf32> -> vector<16x16x16xf32>
    %46 = arith.addf %1, %45 : vector<16x16x16xf32>
    %c0_26 = arith.constant 0 : index
    %c0_27 = arith.constant 0 : index
    %c0_28 = arith.constant 0 : index
    %c0_29 = arith.constant 0 : index
    %47 = vector.load %arg6[%c0_26, %c0_27, %c0_28, %c0_29] : memref<1x16x16x16xf32, #tpu.memory_space<vmem>>, vector<1x16x16x16xf32>
    %48 = vector.shape_cast %47 : vector<1x16x16x16xf32> to vector<16x16x16xf32>
    %49 = vector.shape_cast %46 : vector<16x16x16xf32> to vector<1x16x16x16xf32>
    tpu.vector_store %arg6[%c0_26, %c0_27, %c0_28, %c0_29], %49 {strides = array<i32>} : memref<1x16x16x16xf32, #tpu.memory_space<vmem>>, vector<1x16x16x16xf32>,
    return
  }
  func.func @transform_0(%arg0: i32) -> (i32, i32, i32, i32) {
    %c0_i32 = arith.constant 0 : i32
    %c0_i32_0 = arith.constant 0 : i32
    %c0_i32_1 = arith.constant 0 : i32
    %c0_i32_2 = arith.constant 0 : i32
    return %arg0, %c0_i32, %c0_i32_0, %c0_i32_1 : i32, i32, i32, i32
  }
  func.func @transform_1(%arg0: i32) -> (i32, i32, i32) {
    %c0_i32 = arith.constant 0 : i32
    %c0_i32_0 = arith.constant 0 : i32
    %c0_i32_1 = arith.constant 0 : i32
    %c0_i32_2 = arith.constant 0 : i32
    return %c0_i32, %c0_i32_0, %c0_i32_1 : i32, i32, i32
  }
  func.func @transform_2(%arg0: i32) -> (i32, i32, i32) {
    %c0_i32 = arith.constant 0 : i32
    %c0_i32_0 = arith.constant 0 : i32
    %c0_i32_1 = arith.constant 0 : i32
    %c0_i32_2 = arith.constant 0 : i32
    return %c0_i32, %c0_i32_0, %c0_i32_1 : i32, i32, i32
  }
  func.func @transform_3(%arg0: i32) -> (i32, i32, i32) {
    %c0_i32 = arith.constant 0 : i32
    %c0_i32_0 = arith.constant 0 : i32
    %c0_i32_1 = arith.constant 0 : i32
    %c0_i32_2 = arith.constant 0 : i32
    return %c0_i32, %c0_i32_0, %c0_i32_1 : i32, i32, i32
  }
  func.func @transform_4(%arg0: i32) -> (i32, i32) {
    %c0_i32 = arith.constant 0 : i32
    %c0_i32_0 = arith.constant 0 : i32
    %c0_i32_1 = arith.constant 0 : i32
    return %c0_i32, %c0_i32_0 : i32, i32
  }
  func.func @transform_5(%arg0: i32) -> (i32, i32, i32, i32) {
    %c0_i32 = arith.constant 0 : i32
    %c0_i32_0 = arith.constant 0 : i32
    %c0_i32_1 = arith.constant 0 : i32
    %c0_i32_2 = arith.constant 0 : i32
    return %arg0, %c0_i32, %c0_i32_0, %c0_i32_1 : i32, i32, i32, i32
  }
}

</mosaic_0001>

<llo_original>
// kernel: tpu_custom_call.1
$region0: #{tpu_custom_call.1}
  #allocation0 [shape = 'u32[]', space=smem, size = 0x4, offset = 0x4, fixed_abs, tag = 'smem constant byte address 0x4 - core index']
  #allocation1 [shape = 'u32[144,128]{1,0:T(1,128)}', space=vmem, size = 0x12000, scoped, tag = 'internal scratch']
  %s0 = inlined_call_operand.hbm [shape: f32[2,16,16,16], index: 0, kind: input, shape index: {}]
  %s1 = inlined_call_operand.vmem [shape: f32[1,1,16], index: 1, kind: input, shape index: {}]
  %s2 = inlined_call_operand.vmem [shape: f32[1,1,16], index: 2, kind: input, shape index: {}]
  %s3 = inlined_call_operand.vmem [shape: bf16[3,48,8], index: 3, kind: input, shape index: {}]
  %s4 = inlined_call_operand.vmem [shape: f32[1,8], index: 4, kind: input, shape index: {}]
  %s5 = inlined_call_operand.hbm [shape: f32[2,16,16,16], index: 5, kind: output, shape index: {}]
  %s6 = sld [smem:[#allocation0]]
  $region57: #{tpu_custom_call.1} parent=0
    _
  %s8 = ssub.s32 1, %s6
  %s9 = scalar_select 0, %s8, %s6
  $region1: #{tpu_custom_call.1} parent=0
    #allocation2 [shape = 'u8[262144]{0}', space=vmem, size = 0x40000, scoped, tag = 'input window, operand 0']
    #allocation3 [shape = 's32[2]{0}', space=sflag, size = 0x8, scoped, tag = 'scoped memory for tpu_custom_call.1']
    #allocation4 [shape = 's32[2]{0}', space=sflag, size = 0x8, scoped, tag = 'scoped memory for tpu_custom_call.1']
    #allocation5 [shape = 'u8[262144]{0}', space=vmem, size = 0x40000, scoped, tag = 'output window, operand 0']
    %10 = vsyncpa [#allocation3], 0
    %s11 = scalar_lea.sflag [#allocation3], 1
    %12 = vsyncpa %s11, 0
    %13 = vsyncpa [#allocation4], 0
    %s14 = scalar_lea.sflag [#allocation4], 1
    %15 = vsyncpa %s14, 0
    loop: start=0, step=1, limit=4
    $region2: #{tpu_custom_call.1} parent=1 // loop_pre_header
      _
    $region3: #{tpu_custom_call.1} parent=1 // loop_header
      %s17 = sphi 0, %s21
      %p18 = scmp.ge.s32.totalorder %s17, 4
      %s27 = sphi 0, %s29
      %s30 = sphi 0, %s27
      %s31 = sphi 0, %s30
      %s47 = sphi 0, %s31
      %s51 = sphi 0, %s51
      %s53 = sphi 0, %s51
      %s54 = sphi 0, %s53
      %s68 = sphi 0, %s54
      %s72 = sphi 0, %s72
      %s74 = sphi 0, %s72
      %s75 = sphi 0, %s74
      %s89 = sphi 0, %s75
      %s93 = sphi 0, %s93
      %s95 = sphi 0, %s93
      %s96 = sphi 0, %s95
      %s110 = sphi 0, %s96
      %s114 = sphi 0, %s114
      %s116 = sphi 0, %s114
      %s117 = sphi 0, %s116
      %s131 = sphi 0, %s117
      %s137 = sphi 0, %s139
      %s140 = sphi 0, %s137
      %s141 = sphi 0, %s140
      %s157 = sphi 0, %s141
    $region4: #{tpu_custom_call.1} parent=1 // loop_header_branch
      %20 = sbr.rel (%p18) target = $region8
    $region5: #{tpu_custom_call.1} parent=1 // loop_body
      %s22 = ssub.s32 %s17, 1
      %s23 = ssub.s32 %s17, 2
      %s24 = sadd.s32 %s17, 1
      %s25 = ssub.s32 %s17, %s24
      %p26 = scmp.eq.s32.totalorder %s25, 0
      %s28 = sadd.s32 %s27, 1
      %s29 = scalar_select %p26, %s27, %s28
      %p32 = pneg %p26
      %p33 = scmp.eq.s32.totalorder %s17, 1
      %p34 = por %p32, %p33
      %p35 = scmp.ne.s32.totalorder %s27, %s30
      %p36 = scmp.eq.s32.totalorder %s17, 0
      %p37 = por %p35, %p36
      %p38 = scmp.ne.s32.totalorder %s27, %s30
      %p39 = scmp.eq.s32.totalorder %s22, 1
      %p40 = por %p38, %p39
      %p41 = scmp.ne.s32.totalorder %s30, %s31
      %p42 = scmp.eq.s32.totalorder %s22, 0
      %p43 = por %p41, %p42
      %p44 = scmp.ne.s32.totalorder %s30, %s31
      %p45 = scmp.eq.s32.totalorder %s23, 1
      %p46 = por %p44, %p45
      %p48 = scmp.ne.s32.totalorder %s31, %s47
      %p49 = scmp.eq.s32.totalorder %s23, 0
      %p50 = por %p48, %p49
      %s52 = sadd.s32 %s51, 1
      %p55 = scmp.eq.s32.totalorder %s17, 1
      %p56 = scmp.ne.s32.totalorder %s51, %s53
      %p57 = scmp.eq.s32.totalorder %s17, 0
      %p58 = por %p56, %p57
      %p59 = scmp.ne.s32.totalorder %s51, %s53
      %p60 = scmp.eq.s32.totalorder %s22, 1
      %p61 = por %p59, %p60
      %p62 = scmp.ne.s32.totalorder %s53, %s54
      %p63 = scmp.eq.s32.totalorder %s22, 0
      %p64 = por %p62, %p63
      %p65 = scmp.ne.s32.totalorder %s53, %s54
      %p66 = scmp.eq.s32.totalorder %s23, 1
      %p67 = por %p65, %p66
      %p69 = scmp.ne.s32.totalorder %s54, %s68
      %p70 = scmp.eq.s32.totalorder %s23, 0
      %p71 = por %p69, %p70
      %s73 = sadd.s32 %s72, 1
      %p76 = scmp.eq.s32.totalorder %s17, 1
      %p77 = scmp.ne.s32.totalorder %s72, %s74
      %p78 = scmp.eq.s32.totalorder %s17, 0
      %p79 = por %p77, %p78
      %p80 = scmp.ne.s32.totalorder %s72, %s74
      %p81 = scmp.eq.s32.totalorder %s22, 1
      %p82 = por %p80, %p81
      %p83 = scmp.ne.s32.totalorder %s74, %s75
      %p84 = scmp.eq.s32.totalorder %s22, 0
      %p85 = por %p83, %p84
      %p86 = scmp.ne.s32.totalorder %s74, %s75
      %p87 = scmp.eq.s32.totalorder %s23, 1
      %p88 = por %p86, %p87
      %p90 = scmp.ne.s32.totalorder %s75, %s89
      %p91 = scmp.eq.s32.totalorder %s23, 0
      %p92 = por %p90, %p91
      %s94 = sadd.s32 %s93, 1
      %p97 = scmp.eq.s32.totalorder %s17, 1
      %p98 = scmp.ne.s32.totalorder %s93, %s95
      %p99 = scmp.eq.s32.totalorder %s17, 0
      %p100 = por %p98, %p99
      %p101 = scmp.ne.s32.totalorder %s93, %s95
      %p102 = scmp.eq.s32.totalorder %s22, 1
      %p103 = por %p101, %p102
      %p104 = scmp.ne.s32.totalorder %s95, %s96
      %p105 = scmp.eq.s32.totalorder %s22, 0
      %p106 = por %p104, %p105
      %p107 = scmp.ne.s32.totalorder %s95, %s96
      %p108 = scmp.eq.s32.totalorder %s23, 1
      %p109 = por %p107, %p108
      %p111 = scmp.ne.s32.totalorder %s96, %s110
      %p112 = scmp.eq.s32.totalorder %s23, 0
      %p113 = por %p111, %p112
      %s115 = sadd.s32 %s114, 1
      %p118 = scmp.eq.s32.totalorder %s17, 1
      %p119 = scmp.ne.s32.totalorder %s114, %s116
      %p120 = scmp.eq.s32.totalorder %s17, 0
      %p121 = por %p119, %p120
      %p122 = scmp.ne.s32.totalorder %s114, %s116
      %p123 = scmp.eq.s32.totalorder %s22, 1
      %p124 = por %p122, %p123
      %p125 = scmp.ne.s32.totalorder %s116, %s117
      %p126 = scmp.eq.s32.totalorder %s22, 0
      %p127 = por %p125, %p126
      %p128 = scmp.ne.s32.totalorder %s116, %s117
      %p129 = scmp.eq.s32.totalorder %s23, 1
      %p130 = por %p128, %p129
      %p132 = scmp.ne.s32.totalorder %s117, %s131
      %p133 = scmp.eq.s32.totalorder %s23, 0
      %p134 = por %p132, %p133
      %s135 = ssub.s32 %s17, %s24
      %p136 = scmp.eq.s32.totalorder %s135, 0
      %s138 = sadd.s32 %s137, 1
      %s139 = scalar_select %p136, %s137, %s138
      %p142 = pneg %p136
      %p143 = scmp.eq.s32.totalorder %s17, 1
      %p144 = por %p142, %p143
      %p145 = scmp.ne.s32.totalorder %s137, %s140
      %p146 = scmp.eq.s32.totalorder %s17, 0
      %p147 = por %p145, %p146
      %p148 = scmp.ne.s32.totalorder %s137, %s140
      %p149 = scmp.eq.s32.totalorder %s22, 1
      %p150 = por %p148, %p149
      %p151 = scmp.ne.s32.totalorder %s140, %s141
      %p152 = scmp.eq.s32.totalorder %s22, 0
      %p153 = por %p151, %p152
      %p154 = scmp.ne.s32.totalorder %s140, %s141
      %p155 = scmp.eq.s32.totalorder %s23, 1
      %p156 = por %p154, %p155
      %p158 = scmp.ne.s32.totalorder %s141, %s157
      %p159 = scmp.eq.s32.totalorder %s23, 0
      %p160 = por %p158, %p159
      %p161 = scmp.le.s32.totalorder 1, %s17
      %p162 = scmp.lt.s32.totalorder %s17, 3
      %p163 = pnand %p161, %p162
      %p164 = pneg %p163
      // Predicated region
      $region9: #{tpu_custom_call.1} parent=5 // pred_check
        _
      $region10: #{tpu_custom_call.1} parent=5 // pred_check_branch
        %166 = sbr.rel (%p163) target = $region12
      $region11: #{tpu_custom_call.1} parent=5 // pred_region
        %s167 = ssub.s32 %s17, 1
        // Predicated region
        $region13: #{tpu_custom_call.1} parent=11 // pred_check
          %p168 = pneg %p64
        $region14: #{tpu_custom_call.1} parent=11 // pred_check_branch
          %170 = sbr.rel (%p168) target = $region16
        $region15: #{tpu_custom_call.1} parent=11 // pred_region
          _
        $region16: #{tpu_custom_call.1} parent=11 // pred_fallthru
          _
        // Predicated region
        $region17: #{tpu_custom_call.1} parent=11 // pred_check
          %p171 = pneg %p85
        $region18: #{tpu_custom_call.1} parent=11 // pred_check_branch
          %173 = sbr.rel (%p171) target = $region20
        $region19: #{tpu_custom_call.1} parent=11 // pred_region
          _
        $region20: #{tpu_custom_call.1} parent=11 // pred_fallthru
          _
        // Predicated region
        $region21: #{tpu_custom_call.1} parent=11 // pred_check
          %p174 = pneg %p106
        $region22: #{tpu_custom_call.1} parent=11 // pred_check_branch
          %176 = sbr.rel (%p174) target = $region24
        $region23: #{tpu_custom_call.1} parent=11 // pred_region
          _
        $region24: #{tpu_custom_call.1} parent=11 // pred_fallthru
          _
        // Predicated region
        $region25: #{tpu_custom_call.1} parent=11 // pred_check
          %p177 = pneg %p127
        $region26: #{tpu_custom_call.1} parent=11 // pred_check_branch
          %179 = sbr.rel (%p177) target = $region28
        $region27: #{tpu_custom_call.1} parent=11 // pred_region
          _
        $region28: #{tpu_custom_call.1} parent=11 // pred_fallthru
          _
      $region12: #{tpu_custom_call.1} parent=5 // pred_fallthru
        _
      %p180 = scmp.lt.s32.totalorder %s17, 2
      // Predicated region
      $region29: #{tpu_custom_call.1} parent=5 // pred_check
        %p181 = pneg %p180
      $region30: #{tpu_custom_call.1} parent=5 // pred_check_branch
        %183 = sbr.rel (%p181) target = $region32
      $region31: #{tpu_custom_call.1} parent=5 // pred_region
        // Predicated region
        $region33: #{tpu_custom_call.1} parent=31 // pred_check
          %p184 = pneg %p37
        $region34: #{tpu_custom_call.1} parent=31 // pred_check_branch
          %186 = sbr.rel (%p184) target = $region36
        $region35: #{tpu_custom_call.1} parent=31 // pred_region
          %s187 = sand.u32 %s27, 1
          %s188 = scalar_lea.sflag [#allocation3], %s187
          %s189 = sand.u32 %s27, 1
          %s190 = smul.addr %s189, 256
          %s191 = scalar_lea.vmem [#allocation2], %s190
          %s193 = ssub.s32 4096, 4096
          %194 = vsyncadd %s188, %s193
          %s195 = smul.addr %s17, 32
          %s196 = smul.addr %s195, 128
          %s197 = scalar_lea.hbm %s0, %s196
          %s198 = sshll.u32 %s191, 4
          %s199 = int_to_ptr.vmem [resolvable:$true] %s198
          %204 = dma.hbm_to_vmem [thread:$0]  %s197, 4096, %s199, %s188, 128, 128, 8
        $region36: #{tpu_custom_call.1} parent=31 // pred_fallthru
          _
      $region32: #{tpu_custom_call.1} parent=5 // pred_fallthru
        _
      %p205 = scmp.le.s32.totalorder 1, %s17
      %p206 = scmp.lt.s32.totalorder %s17, 3
      %p207 = pnand %p205, %p206
      %p208 = pneg %p207
      // Predicated region
      $region37: #{tpu_custom_call.1} parent=5 // pred_check
        _
      $region38: #{tpu_custom_call.1} parent=5 // pred_check_branch
        %210 = sbr.rel (%p207) target = $region40
      $region39: #{tpu_custom_call.1} parent=5 // pred_region
        %s211 = ssub.s32 %s17, 1
        %s212 = sand.u32 %s30, 1
        %s213 = scalar_lea.sflag [#allocation3], %s212
        %s214 = sand.u32 %s30, 1
        %s215 = smul.addr %s214, 256
        %s216 = scalar_lea.vmem [#allocation2], %s215
        // Predicated region
        $region41: #{tpu_custom_call.1} parent=39 // pred_check
          %p217 = pneg %p43
        $region42: #{tpu_custom_call.1} parent=39 // pred_check_branch
          %219 = sbr.rel (%p217) target = $region44
        $region43: #{tpu_custom_call.1} parent=39 // pred_region
          %220 = dma.done %s213, 4096
        $region44: #{tpu_custom_call.1} parent=39 // pred_fallthru
          _
        %s221 = sand.u32 %s30, 1
        %s222 = scalar_lea.sflag [#allocation3], %s221
        %s223 = sand.u32 %s30, 1
        %s224 = smul.addr %s223, 256
        %s225 = scalar_lea.vmem [#allocation2], %s224
        %p226 = pneg %p43
        %p227 = pneg %p40
        %p228 = pneg %p64
        %p229 = pneg %p61
        %p230 = pneg %p85
        %p231 = pneg %p82
        %p232 = pneg %p106
        %p233 = pneg %p103
        %p234 = pneg %p127
        %p235 = pneg %p124
        %p236 = pneg %p153
        %p237 = pneg %p150
        %s238 = sand.u32 %s140, 1
        %s239 = scalar_lea.sflag [#allocation4], %s238
        %s240 = sand.u32 %s140, 1
        %s241 = smul.addr %s240, 256
        %s242 = scalar_lea.vmem [#allocation5], %s241
        %v244 = vld [vmem:[%s216] sm:$0xff]
        %v245 = vld [vmem:[%s216 + $0x8] sm:$0xff]
        %v246 = vld [vmem:[%s216 + $0x10] sm:$0xff]
        %v247 = vld [vmem:[%s216 + $0x18] sm:$0xff]
        %v248 = vld [vmem:[%s216 + $0x20] sm:$0xff]
        %v249 = vld [vmem:[%s216 + $0x28] sm:$0xff]
        %v250 = vld [vmem:[%s216 + $0x30] sm:$0xff]
        %v251 = vld [vmem:[%s216 + $0x38] sm:$0xff]
        %v252 = vld [vmem:[%s216 + $0x40] sm:$0xff]
        %v253 = vld [vmem:[%s216 + $0x48] sm:$0xff]
        %v254 = vld [vmem:[%s216 + $0x50] sm:$0xff]
        %v255 = vld [vmem:[%s216 + $0x58] sm:$0xff]
        %v256 = vld [vmem:[%s216 + $0x60] sm:$0xff]
        %v257 = vld [vmem:[%s216 + $0x68] sm:$0xff]
        %v258 = vld [vmem:[%s216 + $0x70] sm:$0xff]
        %v259 = vld [vmem:[%s216 + $0x78] sm:$0xff]
        %v260 = vld [vmem:[%s216 + $0x80] sm:$0xff]
        %v261 = vld [vmem:[%s216 + $0x88] sm:$0xff]
        %v262 = vld [vmem:[%s216 + $0x90] sm:$0xff]
        %v263 = vld [vmem:[%s216 + $0x98] sm:$0xff]
        %v264 = vld [vmem:[%s216 + $0xa0] sm:$0xff]
        %v265 = vld [vmem:[%s216 + $0xa8] sm:$0xff]
        %v266 = vld [vmem:[%s216 + $0xb0] sm:$0xff]
        %v267 = vld [vmem:[%s216 + $0xb8] sm:$0xff]
        %v268 = vld [vmem:[%s216 + $0xc0] sm:$0xff]
        %v269 = vld [vmem:[%s216 + $0xc8] sm:$0xff]
        %v270 = vld [vmem:[%s216 + $0xd0] sm:$0xff]
        %v271 = vld [vmem:[%s216 + $0xd8] sm:$0xff]
        %v272 = vld [vmem:[%s216 + $0xe0] sm:$0xff]
        %v273 = vld [vmem:[%s216 + $0xe8] sm:$0xff]
        %v274 = vld [vmem:[%s216 + $0xf0] sm:$0xff]
        %v275 = vld [vmem:[%s216 + $0xf8] sm:$0xff]
        %v276 = vld [vmem:[%s1] sm:$0x1]
        %v278 = vlaneseq
        %v279 = vshrl.u32 %v278, 7
        %v280 = vsub.s32 0, %v279
        %v281 = vrot.slane %v276, %v280
        %v283 = vmul.f32 %v244, %v281
        %v284 = vmul.f32 %v245, %v281
        %v285 = vmul.f32 %v246, %v281
        %v286 = vmul.f32 %v247, %v281
        %v287 = vmul.f32 %v248, %v281
        %v288 = vmul.f32 %v249, %v281
        %v289 = vmul.f32 %v250, %v281
        %v290 = vmul.f32 %v251, %v281
        %v291 = vmul.f32 %v252, %v281
        %v292 = vmul.f32 %v253, %v281
        %v293 = vmul.f32 %v254, %v281
        %v294 = vmul.f32 %v255, %v281
        %v295 = vmul.f32 %v256, %v281
        %v296 = vmul.f32 %v257, %v281
        %v297 = vmul.f32 %v258, %v281
        %v298 = vmul.f32 %v259, %v281
        %v299 = vmul.f32 %v260, %v281
        %v300 = vmul.f32 %v261, %v281
        %v301 = vmul.f32 %v262, %v281
        %v302 = vmul.f32 %v263, %v281
        %v303 = vmul.f32 %v264, %v281
        %v304 = vmul.f32 %v265, %v281
        %v305 = vmul.f32 %v266, %v281
        %v306 = vmul.f32 %v267, %v281
        %v307 = vmul.f32 %v268, %v281
        %v308 = vmul.f32 %v269, %v281
        %v309 = vmul.f32 %v270, %v281
        %v310 = vmul.f32 %v271, %v281
        %v311 = vmul.f32 %v272, %v281
        %v312 = vmul.f32 %v273, %v281
        %v313 = vmul.f32 %v274, %v281
        %v314 = vmul.f32 %v275, %v281
        %v315 = vld [vmem:[%s2] sm:$0x1]
        %v317 = vlaneseq
        %v318 = vshrl.u32 %v317, 7
        %v319 = vsub.s32 0, %v318
        %v320 = vrot.slane %v315, %v319
        %v322 = vadd.f32 %v283, %v320
        %v323 = vadd.f32 %v284, %v320
        %v324 = vadd.f32 %v285, %v320
        %v325 = vadd.f32 %v286, %v320
        %v326 = vadd.f32 %v287, %v320
        %v327 = vadd.f32 %v288, %v320
        %v328 = vadd.f32 %v289, %v320
        %v329 = vadd.f32 %v290, %v320
        %v330 = vadd.f32 %v291, %v320
        %v331 = vadd.f32 %v292, %v320
        %v332 = vadd.f32 %v293, %v320
        %v333 = vadd.f32 %v294, %v320
        %v334 = vadd.f32 %v295, %v320
        %v335 = vadd.f32 %v296, %v320
        %v336 = vadd.f32 %v297, %v320
        %v337 = vadd.f32 %v298, %v320
        %v338 = vadd.f32 %v299, %v320
        %v339 = vadd.f32 %v300, %v320
        %v340 = vadd.f32 %v301, %v320
        %v341 = vadd.f32 %v302, %v320
        %v342 = vadd.f32 %v303, %v320
        %v343 = vadd.f32 %v304, %v320
        %v344 = vadd.f32 %v305, %v320
        %v345 = vadd.f32 %v306, %v320
        %v346 = vadd.f32 %v307, %v320
        %v347 = vadd.f32 %v308, %v320
        %v348 = vadd.f32 %v309, %v320
        %v349 = vadd.f32 %v310, %v320
        %v350 = vadd.f32 %v311, %v320
        %v351 = vadd.f32 %v312, %v320
        %v352 = vadd.f32 %v313, %v320
        %v353 = vadd.f32 %v314, %v320
        %vm354 = vcmp.ge.f32.partialorder %v322, 0.0
        %vm355 = vcmp.ge.f32.partialorder %v323, 0.0
        %vm356 = vcmp.ge.f32.partialorder %v324, 0.0
        %vm357 = vcmp.ge.f32.partialorder %v325, 0.0
        %vm358 = vcmp.ge.f32.partialorder %v326, 0.0
        %vm359 = vcmp.ge.f32.partialorder %v327, 0.0
        %vm360 = vcmp.ge.f32.partialorder %v328, 0.0
        %vm361 = vcmp.ge.f32.partialorder %v329, 0.0
        %vm362 = vcmp.ge.f32.partialorder %v330, 0.0
        %vm363 = vcmp.ge.f32.partialorder %v331, 0.0
        %vm364 = vcmp.ge.f32.partialorder %v332, 0.0
        %vm365 = vcmp.ge.f32.partialorder %v333, 0.0
        %vm366 = vcmp.ge.f32.partialorder %v334, 0.0
        %vm367 = vcmp.ge.f32.partialorder %v335, 0.0
        %vm368 = vcmp.ge.f32.partialorder %v336, 0.0
        %vm369 = vcmp.ge.f32.partialorder %v337, 0.0
        %vm370 = vcmp.ge.f32.partialorder %v338, 0.0
        %vm371 = vcmp.ge.f32.partialorder %v339, 0.0
        %vm372 = vcmp.ge.f32.partialorder %v340, 0.0
        %vm373 = vcmp.ge.f32.partialorder %v341, 0.0
        %vm374 = vcmp.ge.f32.partialorder %v342, 0.0
        %vm375 = vcmp.ge.f32.partialorder %v343, 0.0
        %vm376 = vcmp.ge.f32.partialorder %v344, 0.0
        %vm377 = vcmp.ge.f32.partialorder %v345, 0.0
        %vm378 = vcmp.ge.f32.partialorder %v346, 0.0
        %vm379 = vcmp.ge.f32.partialorder %v347, 0.0
        %vm380 = vcmp.ge.f32.partialorder %v348, 0.0
        %vm381 = vcmp.ge.f32.partialorder %v349, 0.0
        %vm382 = vcmp.ge.f32.partialorder %v350, 0.0
        %vm383 = vcmp.ge.f32.partialorder %v351, 0.0
        %vm384 = vcmp.ge.f32.partialorder %v352, 0.0
        %vm385 = vcmp.ge.f32.partialorder %v353, 0.0
        %v386 = vsel %vm354, 1.0, -1.0
        %v387 = vsel %vm355, 1.0, -1.0
        %v388 = vsel %vm356, 1.0, -1.0
        %v389 = vsel %vm357, 1.0, -1.0
        %v390 = vsel %vm358, 1.0, -1.0
        %v391 = vsel %vm359, 1.0, -1.0
        %v392 = vsel %vm360, 1.0, -1.0
        %v393 = vsel %vm361, 1.0, -1.0
        %v394 = vsel %vm362, 1.0, -1.0
        %v395 = vsel %vm363, 1.0, -1.0
        %v396 = vsel %vm364, 1.0, -1.0
        %v397 = vsel %vm365, 1.0, -1.0
        %v398 = vsel %vm366, 1.0, -1.0
        %v399 = vsel %vm367, 1.0, -1.0
        %v400 = vsel %vm368, 1.0, -1.0
        %v401 = vsel %vm369, 1.0, -1.0
        %v402 = vsel %vm370, 1.0, -1.0
        %v403 = vsel %vm371, 1.0, -1.0
        %v404 = vsel %vm372, 1.0, -1.0
        %v405 = vsel %vm373, 1.0, -1.0
        %v406 = vsel %vm374, 1.0, -1.0
        %v407 = vsel %vm375, 1.0, -1.0
        %v408 = vsel %vm376, 1.0, -1.0
        %v409 = vsel %vm377, 1.0, -1.0
        %v410 = vsel %vm378, 1.0, -1.0
        %v411 = vsel %vm379, 1.0, -1.0
        %v412 = vsel %vm380, 1.0, -1.0
        %v413 = vsel %vm381, 1.0, -1.0
        %v414 = vsel %vm382, 1.0, -1.0
        %v415 = vsel %vm383, 1.0, -1.0
        %v416 = vsel %vm384, 1.0, -1.0
        %v417 = vsel %vm385, 1.0, -1.0
        %v418 = vpack.c.bf16 %v387, %v386
        %v419 = vpack.c.bf16 %v389, %v388
        %v420 = vpack.c.bf16 %v391, %v390
        %v421 = vpack.c.bf16 %v393, %v392
        %v422 = vpack.c.bf16 %v395, %v394
        %v423 = vpack.c.bf16 %v397, %v396
        %v424 = vpack.c.bf16 %v399, %v398
        %v425 = vpack.c.bf16 %v401, %v400
        %v426 = vpack.c.bf16 %v403, %v402
        %v427 = vpack.c.bf16 %v405, %v404
        %v428 = vpack.c.bf16 %v407, %v406
        %v429 = vpack.c.bf16 %v409, %v408
        %v430 = vpack.c.bf16 %v411, %v410
        %v431 = vpack.c.bf16 %v413, %v412
        %v432 = vpack.c.bf16 %v415, %v414
        %v433 = vpack.c.bf16 %v417, %v416
        %v435 = vshrl.u32 %v418, 16
        %v437 = vrot.slane %v435, 7
        %v438 = vshll.u32 %v418, 16
        %v440 = vor.u32 %v437, %v438
        %v442 = vshrl.u32 %v419, 16
        %v444 = vrot.slane %v442, 7
        %v445 = vshll.u32 %v419, 16
        %v447 = vor.u32 %v444, %v445
        %v449 = vshrl.u32 %v420, 16
        %v451 = vrot.slane %v449, 7
        %v452 = vshll.u32 %v420, 16
        %v454 = vor.u32 %v451, %v452
        %v456 = vshrl.u32 %v421, 16
        %v458 = vrot.slane %v456, 7
        %v459 = vshll.u32 %v421, 16
        %v461 = vor.u32 %v458, %v459
        %v463 = vshrl.u32 %v422, 16
        %v465 = vrot.slane %v463, 7
        %v466 = vshll.u32 %v422, 16
        %v468 = vor.u32 %v465, %v466
        %v470 = vshrl.u32 %v423, 16
        %v472 = vrot.slane %v470, 7
        %v473 = vshll.u32 %v423, 16
        %v475 = vor.u32 %v472, %v473
        %v477 = vshrl.u32 %v424, 16
        %v479 = vrot.slane %v477, 7
        %v480 = vshll.u32 %v424, 16
        %v482 = vor.u32 %v479, %v480
        %v484 = vshrl.u32 %v425, 16
        %v486 = vrot.slane %v484, 7
        %v487 = vshll.u32 %v425, 16
        %v489 = vor.u32 %v486, %v487
        %v491 = vshrl.u32 %v426, 16
        %v493 = vrot.slane %v491, 7
        %v494 = vshll.u32 %v426, 16
        %v496 = vor.u32 %v493, %v494
        %v498 = vshrl.u32 %v427, 16
        %v500 = vrot.slane %v498, 7
        %v501 = vshll.u32 %v427, 16
        %v503 = vor.u32 %v500, %v501
        %v505 = vshrl.u32 %v428, 16
        %v507 = vrot.slane %v505, 7
        %v508 = vshll.u32 %v428, 16
        %v510 = vor.u32 %v507, %v508
        %v512 = vshrl.u32 %v429, 16
        %v514 = vrot.slane %v512, 7
        %v515 = vshll.u32 %v429, 16
        %v517 = vor.u32 %v514, %v515
        %v519 = vshrl.u32 %v430, 16
        %v521 = vrot.slane %v519, 7
        %v522 = vshll.u32 %v430, 16
        %v524 = vor.u32 %v521, %v522
        %v526 = vshrl.u32 %v431, 16
        %v528 = vrot.slane %v526, 7
        %v529 = vshll.u32 %v431, 16
        %v531 = vor.u32 %v528, %v529
        %v533 = vshrl.u32 %v432, 16
        %v535 = vrot.slane %v533, 7
        %v536 = vshll.u32 %v432, 16
        %v538 = vor.u32 %v535, %v536
        %v540 = vshrl.u32 %v433, 16
        %v542 = vrot.slane %v540, 7
        %v543 = vshll.u32 %v433, 16
        %v545 = vor.u32 %v542, %v543
        %vm578 = vcmask 1040384
        %vm579 = vsmask.f32 256
        %vm580 = vmand %vm578, %vm579
        %v581 = vsel %vm580, 0, %v440
        %v582 = vsel %vm580, 0, %v447
        %v583 = vsel %vm580, 0, %v454
        %v584 = vsel %vm580, 0, %v461
        %v585 = vsel %vm580, 0, %v468
        %v586 = vsel %vm580, 0, %v475
        %v587 = vsel %vm580, 0, %v482
        %v588 = vsel %vm580, 0, %v489
        %v589 = vsel %vm580, 0, %v496
        %v590 = vsel %vm580, 0, %v503
        %v591 = vsel %vm580, 0, %v510
        %v592 = vsel %vm580, 0, %v517
        %v593 = vsel %vm580, 0, %v524
        %v594 = vsel %vm580, 0, %v531
        %v595 = vsel %vm580, 0, %v538
        %v596 = vsel %vm580, 0, %v545
        %v597 = vsel %vm580, %v437, 0
        %v598 = vsel %vm580, %v444, 0
        %v599 = vsel %vm580, %v451, 0
        %v600 = vsel %vm580, %v458, 0
        %v601 = vsel %vm580, %v465, 0
        %v602 = vsel %vm580, %v472, 0
        %v603 = vsel %vm580, %v479, 0
        %v604 = vsel %vm580, %v486, 0
        %v605 = vsel %vm580, %v493, 0
        %v606 = vsel %vm580, %v500, 0
        %v607 = vsel %vm580, %v507, 0
        %v608 = vsel %vm580, %v514, 0
        %v609 = vsel %vm580, %v521, 0
        %v610 = vsel %vm580, %v528, 0
        %v611 = vsel %vm580, %v535, 0
        %v612 = vsel %vm580, %v542, 0
        %vm613 = vsmask.f32 7424
        %v615 = vshrl.u32 0, 16
        %v617 = vshll.u32 0, 16
        %v619 = vrot.slane %v617, 1
        %v620 = vor.u32 %v615, %v619
        %v621 = vsel %vm613, %v620, %v619
        %v623 = vshrl.u32 %v581, 16
        %v625 = vshll.u32 %v581, 16
        %v627 = vrot.slane %v625, 1
        %v628 = vor.u32 %v623, %v627
        %v630 = vshll.u32 %v597, 16
        %v632 = vrot.slane %v630, 1
        %v633 = vsel %vm613, %v628, %v632
        %v635 = vshrl.u32 %v582, 16
        %v637 = vshll.u32 %v582, 16
        %v639 = vrot.slane %v637, 1
        %v640 = vor.u32 %v635, %v639
        %v642 = vshll.u32 %v598, 16
        %v644 = vrot.slane %v642, 1
        %v645 = vsel %vm613, %v640, %v644
        %v647 = vshrl.u32 %v583, 16
        %v649 = vshll.u32 %v583, 16
        %v651 = vrot.slane %v649, 1
        %v652 = vor.u32 %v647, %v651
        %v654 = vshll.u32 %v599, 16
        %v656 = vrot.slane %v654, 1
        %v657 = vsel %vm613, %v652, %v656
        %v659 = vshrl.u32 %v584, 16
        %v661 = vshll.u32 %v584, 16
        %v663 = vrot.slane %v661, 1
        %v664 = vor.u32 %v659, %v663
        %v666 = vshll.u32 %v600, 16
        %v668 = vrot.slane %v666, 1
        %v669 = vsel %vm613, %v664, %v668
        %v671 = vshrl.u32 %v585, 16
        %v673 = vshll.u32 %v585, 16
        %v675 = vrot.slane %v673, 1
        %v676 = vor.u32 %v671, %v675
        %v678 = vshll.u32 %v601, 16
        %v680 = vrot.slane %v678, 1
        %v681 = vsel %vm613, %v676, %v680
        %v683 = vshrl.u32 %v586, 16
        %v685 = vshll.u32 %v586, 16
        %v687 = vrot.slane %v685, 1
        %v688 = vor.u32 %v683, %v687
        %v690 = vshll.u32 %v602, 16
        %v692 = vrot.slane %v690, 1
        %v693 = vsel %vm613, %v688, %v692
        %v695 = vshrl.u32 %v587, 16
        %v697 = vshll.u32 %v587, 16
        %v699 = vrot.slane %v697, 1
        %v700 = vor.u32 %v695, %v699
        %v702 = vshll.u32 %v603, 16
        %v704 = vrot.slane %v702, 1
        %v705 = vsel %vm613, %v700, %v704
        %v707 = vshrl.u32 %v588, 16
        %v709 = vshll.u32 %v588, 16
        %v711 = vrot.slane %v709, 1
        %v712 = vor.u32 %v707, %v711
        %v714 = vshll.u32 %v604, 16
        %v716 = vrot.slane %v714, 1
        %v717 = vsel %vm613, %v712, %v716
        %v719 = vshrl.u32 %v589, 16
        %v721 = vshll.u32 %v589, 16
        %v723 = vrot.slane %v721, 1
        %v724 = vor.u32 %v719, %v723
        %v726 = vshll.u32 %v605, 16
        %v728 = vrot.slane %v726, 1
        %v729 = vsel %vm613, %v724, %v728
        %v731 = vshrl.u32 %v590, 16
        %v733 = vshll.u32 %v590, 16
        %v735 = vrot.slane %v733, 1
        %v736 = vor.u32 %v731, %v735
        %v738 = vshll.u32 %v606, 16
        %v740 = vrot.slane %v738, 1
        %v741 = vsel %vm613, %v736, %v740
        %v743 = vshrl.u32 %v591, 16
        %v745 = vshll.u32 %v591, 16
        %v747 = vrot.slane %v745, 1
        %v748 = vor.u32 %v743, %v747
        %v750 = vshll.u32 %v607, 16
        %v752 = vrot.slane %v750, 1
        %v753 = vsel %vm613, %v748, %v752
        %v755 = vshrl.u32 %v592, 16
        %v757 = vshll.u32 %v592, 16
        %v759 = vrot.slane %v757, 1
        %v760 = vor.u32 %v755, %v759
        %v762 = vshll.u32 %v608, 16
        %v764 = vrot.slane %v762, 1
        %v765 = vsel %vm613, %v760, %v764
        %v767 = vshrl.u32 %v593, 16
        %v769 = vshll.u32 %v593, 16
        %v771 = vrot.slane %v769, 1
        %v772 = vor.u32 %v767, %v771
        %v774 = vshll.u32 %v609, 16
        %v776 = vrot.slane %v774, 1
        %v777 = vsel %vm613, %v772, %v776
        %v779 = vshrl.u32 %v594, 16
        %v781 = vshll.u32 %v594, 16
        %v783 = vrot.slane %v781, 1
        %v784 = vor.u32 %v779, %v783
        %v786 = vshll.u32 %v610, 16
        %v788 = vrot.slane %v786, 1
        %v789 = vsel %vm613, %v784, %v788
        %v791 = vshrl.u32 %v595, 16
        %v793 = vshll.u32 %v595, 16
        %v795 = vrot.slane %v793, 1
        %v796 = vor.u32 %v791, %v795
        %v798 = vshll.u32 %v611, 16
        %v800 = vrot.slane %v798, 1
        %v801 = vsel %vm613, %v796, %v800
        %v803 = vshrl.u32 %v596, 16
        %v805 = vshll.u32 %v596, 16
        %v807 = vrot.slane %v805, 1
        %v808 = vor.u32 %v803, %v807
        %v810 = vshll.u32 %v612, 16
        %v812 = vrot.slane %v810, 1
        %v813 = vsel %vm613, %v808, %v812
        %814 = vrot.lane.b32.xlu0 %v621, 16
        %v815 = vpop.permute.xlu0 %814
        %816 = vrot.lane.b32.xlu0 %v633, 16
        %v817 = vpop.permute.xlu0 %816
        %818 = vrot.lane.b32.xlu0 %v645, 16
        %v819 = vpop.permute.xlu0 %818
        %820 = vrot.lane.b32.xlu0 %v657, 16
        %v821 = vpop.permute.xlu0 %820
        %822 = vrot.lane.b32.xlu0 %v669, 16
        %v823 = vpop.permute.xlu0 %822
        %824 = vrot.lane.b32.xlu0 %v681, 16
        %v825 = vpop.permute.xlu0 %824
        %826 = vrot.lane.b32.xlu0 %v693, 16
        %v827 = vpop.permute.xlu0 %826
        %828 = vrot.lane.b32.xlu0 %v705, 16
        %v829 = vpop.permute.xlu0 %828
        %830 = vrot.lane.b32.xlu0 %v717, 16
        %v831 = vpop.permute.xlu0 %830
        %832 = vrot.lane.b32.xlu0 %v729, 16
        %v833 = vpop.permute.xlu0 %832
        %834 = vrot.lane.b32.xlu0 %v741, 16
        %v835 = vpop.permute.xlu0 %834
        %836 = vrot.lane.b32.xlu0 %v753, 16
        %v837 = vpop.permute.xlu0 %836
        %838 = vrot.lane.b32.xlu0 %v765, 16
        %v839 = vpop.permute.xlu0 %838
        %840 = vrot.lane.b32.xlu0 %v777, 16
        %v841 = vpop.permute.xlu0 %840
        %842 = vrot.lane.b32.xlu0 %v789, 16
        %v843 = vpop.permute.xlu0 %842
        %844 = vrot.lane.b32.xlu0 %v801, 16
        %v845 = vpop.permute.xlu0 %844
        %846 = vrot.lane.b32.xlu0 %v813, 16
        %v847 = vpop.permute.xlu0 %846
        %vm881 = vcmask 1046528
        %v882 = vrot.slane 0, 1
        %v883 = vsel %vm881, %v882, %v882
        %v884 = vrot.slane %v581, 1
        %v885 = vrot.slane %v597, 1
        %v886 = vsel %vm881, %v884, %v885
        %v887 = vrot.slane %v582, 1
        %v888 = vrot.slane %v598, 1
        %v889 = vsel %vm881, %v887, %v888
        %v890 = vrot.slane %v583, 1
        %v891 = vrot.slane %v599, 1
        %v892 = vsel %vm881, %v890, %v891
        %v893 = vrot.slane %v584, 1
        %v894 = vrot.slane %v600, 1
        %v895 = vsel %vm881, %v893, %v894
        %v896 = vrot.slane %v585, 1
        %v897 = vrot.slane %v601, 1
        %v898 = vsel %vm881, %v896, %v897
        %v899 = vrot.slane %v586, 1
        %v900 = vrot.slane %v602, 1
        %v901 = vsel %vm881, %v899, %v900
        %v902 = vrot.slane %v587, 1
        %v903 = vrot.slane %v603, 1
        %v904 = vsel %vm881, %v902, %v903
        %v905 = vrot.slane %v588, 1
        %v906 = vrot.slane %v604, 1
        %v907 = vsel %vm881, %v905, %v906
        %v908 = vrot.slane %v589, 1
        %v909 = vrot.slane %v605, 1
        %v910 = vsel %vm881, %v908, %v909
        %v911 = vrot.slane %v590, 1
        %v912 = vrot.slane %v606, 1
        %v913 = vsel %vm881, %v911, %v912
        %v914 = vrot.slane %v591, 1
        %v915 = vrot.slane %v607, 1
        %v916 = vsel %vm881, %v914, %v915
        %v917 = vrot.slane %v592, 1
        %v918 = vrot.slane %v608, 1
        %v919 = vsel %vm881, %v917, %v918
        %v920 = vrot.slane %v593, 1
        %v921 = vrot.slane %v609, 1
        %v922 = vsel %vm881, %v920, %v921
        %v923 = vrot.slane %v594, 1
        %v924 = vrot.slane %v610, 1
        %v925 = vsel %vm881, %v923, %v924
        %v926 = vrot.slane %v595, 1
        %v927 = vrot.slane %v611, 1
        %v928 = vsel %vm881, %v926, %v927
        %v929 = vrot.slane %v596, 1
        %v930 = vrot.slane %v612, 1
        %v931 = vsel %vm881, %v929, %v930
        %932 = vrot.lane.b32.xlu0 %v883, 32
        %v933 = vpop.permute.xlu0 %932
        %934 = vrot.lane.b32.xlu0 %v886, 32
        %v935 = vpop.permute.xlu0 %934
        %936 = vrot.lane.b32.xlu0 %v889, 32
        %v937 = vpop.permute.xlu0 %936
        %938 = vrot.lane.b32.xlu0 %v892, 32
        %v939 = vpop.permute.xlu0 %938
        %940 = vrot.lane.b32.xlu0 %v895, 32
        %v941 = vpop.permute.xlu0 %940
        %942 = vrot.lane.b32.xlu0 %v898, 32
        %v943 = vpop.permute.xlu0 %942
        %944 = vrot.lane.b32.xlu0 %v901, 32
        %v945 = vpop.permute.xlu0 %944
        %946 = vrot.lane.b32.xlu0 %v904, 32
        %v947 = vpop.permute.xlu0 %946
        %948 = vrot.lane.b32.xlu0 %v907, 32
        %v949 = vpop.permute.xlu0 %948
        %950 = vrot.lane.b32.xlu0 %v910, 32
        %v951 = vpop.permute.xlu0 %950
        %952 = vrot.lane.b32.xlu0 %v913, 32
        %v953 = vpop.permute.xlu0 %952
        %954 = vrot.lane.b32.xlu0 %v916, 32
        %v955 = vpop.permute.xlu0 %954
        %956 = vrot.lane.b32.xlu0 %v919, 32
        %v957 = vpop.permute.xlu0 %956
        %958 = vrot.lane.b32.xlu0 %v922, 32
        %v959 = vpop.permute.xlu0 %958
        %960 = vrot.lane.b32.xlu0 %v925, 32
        %v961 = vpop.permute.xlu0 %960
        %962 = vrot.lane.b32.xlu0 %v928, 32
        %v963 = vpop.permute.xlu0 %962
        %964 = vrot.lane.b32.xlu0 %v931, 32
        %v965 = vpop.permute.xlu0 %964
        %vm966 = vcmask 130048
        %v968 = vsel %vm966, 0, %v815
        %v970 = vsel %vm966, %v581, %v817
        %v972 = vsel %vm966, %v582, %v819
        %v974 = vsel %vm966, %v583, %v821
        %v976 = vsel %vm966, %v584, %v823
        %v978 = vsel %vm966, %v585, %v825
        %v980 = vsel %vm966, %v586, %v827
        %v982 = vsel %vm966, %v587, %v829
        %v984 = vsel %vm966, %v588, %v831
        %v986 = vsel %vm966, %v589, %v833
        %v988 = vsel %vm966, %v590, %v835
        %v990 = vsel %vm966, %v591, %v837
        %v992 = vsel %vm966, %v592, %v839
        %v994 = vsel %vm966, %v593, %v841
        %v996 = vsel %vm966, %v594, %v843
        %v998 = vsel %vm966, %v595, %v845
        %v1000 = vsel %vm966, %v596, %v847
        %vm1001 = vcmask 261120
        %v1003 = vsel %vm1001, %v968, %v933
        %v1005 = vsel %vm1001, %v970, %v935
        %v1007 = vsel %vm1001, %v972, %v937
        %v1009 = vsel %vm1001, %v974, %v939
        %v1011 = vsel %vm1001, %v976, %v941
        %v1013 = vsel %vm1001, %v978, %v943
        %v1015 = vsel %vm1001, %v980, %v945
        %v1017 = vsel %vm1001, %v982, %v947
        %v1019 = vsel %vm1001, %v984, %v949
        %v1021 = vsel %vm1001, %v986, %v951
        %v1023 = vsel %vm1001, %v988, %v953
        %v1025 = vsel %vm1001, %v990, %v955
        %v1027 = vsel %vm1001, %v992, %v957
        %v1029 = vsel %vm1001, %v994, %v959
        %v1031 = vsel %vm1001, %v996, %v961
        %v1033 = vsel %vm1001, %v998, %v963
        %v1035 = vsel %vm1001, %v1000, %v965
        %v1036 = vld [vmem:[%s4] sm:$0x1]
        %v1038 = vlaneseq
        %v1039 = vshrl.u32 %v1038, 7
        %v1040 = vsub.s32 0, %v1039
        %v1041 = vrot.slane %v1036, %v1040
        %v1043 = vld [vmem:[%s3] sm:$0xf]
        %v1044 = vld [vmem:[%s3 + $0x4] sm:$0xf]
        %v1045 = vld [vmem:[%s3 + $0x8] sm:$0xf]
        %v1046 = vld [vmem:[%s3 + $0xc] sm:$0xf]
        %v1047 = vld [vmem:[%s3 + $0x10] sm:$0xf]
        %v1048 = vld [vmem:[%s3 + $0x14] sm:$0xf]
        %v1055 = vunpack.c.l.b16 %v1043
        %v1056 = vunpack.c.l.b16 %v1044
        %v1057 = vunpack.c.l.b16 %v1045
        %v1058 = vunpack.c.l.b16 %v1046
        %v1059 = vunpack.c.l.b16 %v1047
        %v1060 = vunpack.c.l.b16 %v1048
        %v1061 = vpack.c.b16 %v1056, %v1055
        %v1062 = vpack.c.b16 %v1058, %v1057
        %v1063 = vpack.c.b16 %v1060, %v1059
        %vm1067 = vcmask 392192
        %v1068 = vsel %vm1067, %v1003, 0
        %v1070 = vsel %vm1067, %v1005, 0
        %v1072 = vsel %vm1067, %v1007, 0
        %v1074 = vsel %vm1067, %v1009, 0
        %v1076 = vsel %vm1067, %v1011, 0
        %v1078 = vsel %vm1067, %v1013, 0
        %v1080 = vsel %vm1067, %v1015, 0
        %v1082 = vsel %vm1067, %v1017, 0
        %v1084 = vsel %vm1067, %v1019, 0
        %v1086 = vsel %vm1067, %v1021, 0
        %v1088 = vsel %vm1067, %v1023, 0
        %v1090 = vsel %vm1067, %v1025, 0
        %v1092 = vsel %vm1067, %v1027, 0
        %v1094 = vsel %vm1067, %v1029, 0
        %v1096 = vsel %vm1067, %v1031, 0
        %v1098 = vsel %vm1067, %v1033, 0
        %1100 = vmatprep.subr.bf16.mxu0 0
        %1101 = vmatpush1.bf16.msra.mxu0 0
        %1102 = vmatprep.subr.bf16.mxu0 0
        %1103 = vmatpush1.bf16.msra.mxu0 0
        %1104 = vmatprep.subr.bf16.mxu0 0
        %1105 = vmatpush1.bf16.msra.mxu0 0
        %1106 = vmatprep.subr.bf16.mxu0 0
        %1107 = vmatpush1.bf16.msra.mxu0 0
        %1108 = vmatprep.subr.bf16.mxu0 0
        %1109 = vmatpush1.bf16.msra.mxu0 0
        %1110 = vmatprep.subr.bf16.mxu0 0
        %1111 = vmatpush1.bf16.msra.mxu0 %v1063
        %1112 = vmatprep.subr.bf16.mxu0 0
        %1113 = vmatpush1.bf16.msra.mxu0 %v1062
        %1114 = vmatprep.subr.bf16.mxu0 0
        %1115 = vmatpush1.bf16.msra.mxu0 %v1061
        %1116 = vmatprep.subr.bf16.mxu0 0
        %1117 = vmatpush2.bf16.msra.mxu0 0
        %1118 = vmatprep.subr.bf16.mxu0 0
        %1119 = vmatpush2.bf16.msra.mxu0 0
        %1120 = vmatprep.subr.bf16.mxu0 0
        %1121 = vmatpush2.bf16.msra.mxu0 0
        %1122 = vmatprep.subr.bf16.mxu0 0
        %1123 = vmatpush2.bf16.msra.mxu0 0
        %1124 = vmatprep.subr.bf16.mxu0 0
        %1125 = vmatpush2.bf16.msra.mxu0 0
        %1126 = vmatprep.subr.bf16.mxu0 0
        %1127 = vmatpush2.bf16.msra.mxu0 0
        %1128 = vmatprep.subr.bf16.mxu0 0
        %1129 = vmatpush2.bf16.msra.mxu0 0
        %1130 = vmatprep.subr.bf16.mxu0 0
        %1131 = vmatpush2.bf16.msra.mxu0 0
        %1132 = vmatprep.mubr.bf16.mxu0 0
        %1133 = vmatmul.mubr.bf16.gmra.mxu0 %v1068
        %v1134 = vpop.f32.mrf.mxu0
        %v1135 = vadd.f32 0.0, %v1134
        %v1136 = vpop.f32.mrf.mxu0
        %v1137 = vpop.f32.mrf.mxu0
        %v1138 = vadd.f32 0.0, %v1137
        %v1139 = vpop.f32.mrf.mxu0
        %1140 = vmatprep.mubr.bf16.mxu0 0
        %1141 = vmatmul.mubr.bf16.gmra.mxu0 %v1070
        %v1142 = vpop.f32.mrf.mxu0
        %v1143 = vadd.f32 0.0, %v1142
        %v1144 = vpop.f32.mrf.mxu0
        %v1145 = vpop.f32.mrf.mxu0
        %v1146 = vadd.f32 0.0, %v1145
        %v1147 = vpop.f32.mrf.mxu0
        %1148 = vmatprep.mubr.bf16.mxu0 0
        %1149 = vmatmul.mubr.bf16.gmra.mxu0 %v1072
        %v1150 = vpop.f32.mrf.mxu0
        %v1151 = vadd.f32 0.0, %v1150
        %v1152 = vpop.f32.mrf.mxu0
        %v1153 = vpop.f32.mrf.mxu0
        %v1154 = vadd.f32 0.0, %v1153
        %v1155 = vpop.f32.mrf.mxu0
        %1156 = vmatprep.mubr.bf16.mxu0 0
        %1157 = vmatmul.mubr.bf16.gmra.mxu0 %v1074
        %v1158 = vpop.f32.mrf.mxu0
        %v1159 = vadd.f32 0.0, %v1158
        %v1160 = vpop.f32.mrf.mxu0
        %v1161 = vpop.f32.mrf.mxu0
        %v1162 = vadd.f32 0.0, %v1161
        %v1163 = vpop.f32.mrf.mxu0
        %1164 = vmatprep.mubr.bf16.mxu0 0
        %1165 = vmatmul.mubr.bf16.gmra.mxu0 %v1076
        %v1166 = vpop.f32.mrf.mxu0
        %v1167 = vadd.f32 0.0, %v1166
        %v1168 = vpop.f32.mrf.mxu0
        %v1169 = vpop.f32.mrf.mxu0
        %v1170 = vadd.f32 0.0, %v1169
        %v1171 = vpop.f32.mrf.mxu0
        %1172 = vmatprep.mubr.bf16.mxu0 0
        %1173 = vmatmul.mubr.bf16.gmra.mxu0 %v1078
        %v1174 = vpop.f32.mrf.mxu0
        %v1175 = vadd.f32 0.0, %v1174
        %v1176 = vpop.f32.mrf.mxu0
        %v1177 = vpop.f32.mrf.mxu0
        %v1178 = vadd.f32 0.0, %v1177
        %v1179 = vpop.f32.mrf.mxu0
        %1180 = vmatprep.mubr.bf16.mxu0 0
        %1181 = vmatmul.mubr.bf16.gmra.mxu0 %v1080
        %v1182 = vpop.f32.mrf.mxu0
        %v1183 = vadd.f32 0.0, %v1182
        %v1184 = vpop.f32.mrf.mxu0
        %v1185 = vpop.f32.mrf.mxu0
        %v1186 = vadd.f32 0.0, %v1185
        %v1187 = vpop.f32.mrf.mxu0
        %1188 = vmatprep.mubr.bf16.mxu0 0
        %1189 = vmatmul.mubr.bf16.gmra.mxu0 %v1082
        %v1190 = vpop.f32.mrf.mxu0
        %v1191 = vadd.f32 0.0, %v1190
        %v1192 = vpop.f32.mrf.mxu0
        %v1193 = vpop.f32.mrf.mxu0
        %v1194 = vadd.f32 0.0, %v1193
        %v1195 = vpop.f32.mrf.mxu0
        %1196 = vmatprep.mubr.bf16.mxu0 0
        %1197 = vmatmul.mubr.bf16.gmra.mxu0 %v1084
        %v1198 = vpop.f32.mrf.mxu0
        %v1199 = vadd.f32 0.0, %v1198
        %v1200 = vpop.f32.mrf.mxu0
        %v1201 = vpop.f32.mrf.mxu0
        %v1202 = vadd.f32 0.0, %v1201
        %v1203 = vpop.f32.mrf.mxu0
        %1204 = vmatprep.mubr.bf16.mxu0 0
        %1205 = vmatmul.mubr.bf16.gmra.mxu0 %v1086
        %v1206 = vpop.f32.mrf.mxu0
        %v1207 = vadd.f32 0.0, %v1206
        %v1208 = vpop.f32.mrf.mxu0
        %v1209 = vpop.f32.mrf.mxu0
        %v1210 = vadd.f32 0.0, %v1209
        %v1211 = vpop.f32.mrf.mxu0
        %1212 = vmatprep.mubr.bf16.mxu0 0
        %1213 = vmatmul.mubr.bf16.gmra.mxu0 %v1088
        %v1214 = vpop.f32.mrf.mxu0
        %v1215 = vadd.f32 0.0, %v1214
        %v1216 = vpop.f32.mrf.mxu0
        %v1217 = vpop.f32.mrf.mxu0
        %v1218 = vadd.f32 0.0, %v1217
        %v1219 = vpop.f32.mrf.mxu0
        %1220 = vmatprep.mubr.bf16.mxu0 0
        %1221 = vmatmul.mubr.bf16.gmra.mxu0 %v1090
        %v1222 = vpop.f32.mrf.mxu0
        %v1223 = vadd.f32 0.0, %v1222
        %v1224 = vpop.f32.mrf.mxu0
        %v1225 = vpop.f32.mrf.mxu0
        %v1226 = vadd.f32 0.0, %v1225
        %v1227 = vpop.f32.mrf.mxu0
        %1228 = vmatprep.mubr.bf16.mxu0 0
        %1229 = vmatmul.mubr.bf16.gmra.mxu0 %v1092
        %v1230 = vpop.f32.mrf.mxu0
        %v1231 = vadd.f32 0.0, %v1230
        %v1232 = vpop.f32.mrf.mxu0
        %v1233 = vpop.f32.mrf.mxu0
        %v1234 = vadd.f32 0.0, %v1233
        %v1235 = vpop.f32.mrf.mxu0
        %1236 = vmatprep.mubr.bf16.mxu0 0
        %1237 = vmatmul.mubr.bf16.gmra.mxu0 %v1094
        %v1238 = vpop.f32.mrf.mxu0
        %v1239 = vadd.f32 0.0, %v1238
        %v1240 = vpop.f32.mrf.mxu0
        %v1241 = vpop.f32.mrf.mxu0
        %v1242 = vadd.f32 0.0, %v1241
        %v1243 = vpop.f32.mrf.mxu0
        %1244 = vmatprep.mubr.bf16.mxu0 0
        %1245 = vmatmul.mubr.bf16.gmra.mxu0 %v1096
        %v1246 = vpop.f32.mrf.mxu0
        %v1247 = vadd.f32 0.0, %v1246
        %v1248 = vpop.f32.mrf.mxu0
        %v1249 = vpop.f32.mrf.mxu0
        %v1250 = vadd.f32 0.0, %v1249
        %v1251 = vpop.f32.mrf.mxu0
        %1252 = vmatprep.mubr.bf16.mxu0 0
        %1253 = vmatmul.mubr.bf16.gmra.mxu0 %v1098
        %v1254 = vpop.f32.mrf.mxu0
        %v1255 = vadd.f32 0.0, %v1254
        %v1256 = vpop.f32.mrf.mxu0
        %v1257 = vpop.f32.mrf.mxu0
        %v1258 = vadd.f32 0.0, %v1257
        %v1259 = vpop.f32.mrf.mxu0
        %1260 = vdwg.mxu0
        %v1261 = vadd.f32 %v1041, %v1135
        %v1262 = vadd.f32 %v1041, %v1138
        %v1263 = vadd.f32 %v1041, %v1143
        %v1264 = vadd.f32 %v1041, %v1146
        %v1265 = vadd.f32 %v1041, %v1151
        %v1266 = vadd.f32 %v1041, %v1154
        %v1267 = vadd.f32 %v1041, %v1159
        %v1268 = vadd.f32 %v1041, %v1162
        %v1269 = vadd.f32 %v1041, %v1167
        %v1270 = vadd.f32 %v1041, %v1170
        %v1271 = vadd.f32 %v1041, %v1175
        %v1272 = vadd.f32 %v1041, %v1178
        %v1273 = vadd.f32 %v1041, %v1183
        %v1274 = vadd.f32 %v1041, %v1186
        %v1275 = vadd.f32 %v1041, %v1191
        %v1276 = vadd.f32 %v1041, %v1194
        %v1277 = vadd.f32 %v1041, %v1199
        %v1278 = vadd.f32 %v1041, %v1202
        %v1279 = vadd.f32 %v1041, %v1207
        %v1280 = vadd.f32 %v1041, %v1210
        %v1281 = vadd.f32 %v1041, %v1215
        %v1282 = vadd.f32 %v1041, %v1218
        %v1283 = vadd.f32 %v1041, %v1223
        %v1284 = vadd.f32 %v1041, %v1226
        %v1285 = vadd.f32 %v1041, %v1231
        %v1286 = vadd.f32 %v1041, %v1234
        %v1287 = vadd.f32 %v1041, %v1239
        %v1288 = vadd.f32 %v1041, %v1242
        %v1289 = vadd.f32 %v1041, %v1247
        %v1290 = vadd.f32 %v1041, %v1250
        %v1291 = vadd.f32 %v1041, %v1255
        %v1292 = vadd.f32 %v1041, %v1258
        %s1293 = scalar_lea.vmem %s3, 24
        %v1294 = vld [vmem:[%s1293] sm:$0xf]
        %v1295 = vld [vmem:[%s1293 + $0x4] sm:$0xf]
        %v1296 = vld [vmem:[%s1293 + $0x8] sm:$0xf]
        %v1297 = vld [vmem:[%s1293 + $0xc] sm:$0xf]
        %v1298 = vld [vmem:[%s1293 + $0x10] sm:$0xf]
        %v1299 = vld [vmem:[%s1293 + $0x14] sm:$0xf]
        %v1306 = vunpack.c.l.b16 %v1294
        %v1307 = vunpack.c.l.b16 %v1295
        %v1308 = vunpack.c.l.b16 %v1296
        %v1309 = vunpack.c.l.b16 %v1297
        %v1310 = vunpack.c.l.b16 %v1298
        %v1311 = vunpack.c.l.b16 %v1299
        %v1312 = vpack.c.b16 %v1307, %v1306
        %v1313 = vpack.c.b16 %v1309, %v1308
        %v1314 = vpack.c.b16 %v1311, %v1310
        %v1318 = vsel %vm1067, %v1035, 0
        %1320 = vmatprep.subr.bf16.mxu0 0
        %1321 = vmatpush1.bf16.msra.mxu0 0
        %1322 = vmatprep.subr.bf16.mxu0 0
        %1323 = vmatpush1.bf16.msra.mxu0 0
        %1324 = vmatprep.subr.bf16.mxu0 0
        %1325 = vmatpush1.bf16.msra.mxu0 0
        %1326 = vmatprep.subr.bf16.mxu0 0
        %1327 = vmatpush1.bf16.msra.mxu0 0
        %1328 = vmatprep.subr.bf16.mxu0 0
        %1329 = vmatpush1.bf16.msra.mxu0 0
        %1330 = vmatprep.subr.bf16.mxu0 0
        %1331 = vmatpush1.bf16.msra.mxu0 %v1314
        %1332 = vmatprep.subr.bf16.mxu0 0
        %1333 = vmatpush1.bf16.msra.mxu0 %v1313
        %1334 = vmatprep.subr.bf16.mxu0 0
        %1335 = vmatpush1.bf16.msra.mxu0 %v1312
        %1336 = vmatprep.subr.bf16.mxu0 0
        %1337 = vmatpush2.bf16.msra.mxu0 0
        %1338 = vmatprep.subr.bf16.mxu0 0
        %1339 = vmatpush2.bf16.msra.mxu0 0
        %1340 = vmatprep.subr.bf16.mxu0 0
        %1341 = vmatpush2.bf16.msra.mxu0 0
        %1342 = vmatprep.subr.bf16.mxu0 0
        %1343 = vmatpush2.bf16.msra.mxu0 0
        %1344 = vmatprep.subr.bf16.mxu0 0
        %1345 = vmatpush2.bf16.msra.mxu0 0
        %1346 = vmatprep.subr.bf16.mxu0 0
        %1347 = vmatpush2.bf16.msra.mxu0 0
        %1348 = vmatprep.subr.bf16.mxu0 0
        %1349 = vmatpush2.bf16.msra.mxu0 0
        %1350 = vmatprep.subr.bf16.mxu0 0
        %1351 = vmatpush2.bf16.msra.mxu0 0
        %1352 = vmatprep.mubr.bf16.mxu0 0
        %1353 = vmatmul.mubr.bf16.gmra.mxu0 %v1070
        %v1354 = vpop.f32.mrf.mxu0
        %v1355 = vadd.f32 0.0, %v1354
        %v1356 = vpop.f32.mrf.mxu0
        %v1357 = vpop.f32.mrf.mxu0
        %v1358 = vadd.f32 0.0, %v1357
        %v1359 = vpop.f32.mrf.mxu0
        %1360 = vmatprep.mubr.bf16.mxu0 0
        %1361 = vmatmul.mubr.bf16.gmra.mxu0 %v1072
        %v1362 = vpop.f32.mrf.mxu0
        %v1363 = vadd.f32 0.0, %v1362
        %v1364 = vpop.f32.mrf.mxu0
        %v1365 = vpop.f32.mrf.mxu0
        %v1366 = vadd.f32 0.0, %v1365
        %v1367 = vpop.f32.mrf.mxu0
        %1368 = vmatprep.mubr.bf16.mxu0 0
        %1369 = vmatmul.mubr.bf16.gmra.mxu0 %v1074
        %v1370 = vpop.f32.mrf.mxu0
        %v1371 = vadd.f32 0.0, %v1370
        %v1372 = vpop.f32.mrf.mxu0
        %v1373 = vpop.f32.mrf.mxu0
        %v1374 = vadd.f32 0.0, %v1373
        %v1375 = vpop.f32.mrf.mxu0
        %1376 = vmatprep.mubr.bf16.mxu0 0
        %1377 = vmatmul.mubr.bf16.gmra.mxu0 %v1076
        %v1378 = vpop.f32.mrf.mxu0
        %v1379 = vadd.f32 0.0, %v1378
        %v1380 = vpop.f32.mrf.mxu0
        %v1381 = vpop.f32.mrf.mxu0
        %v1382 = vadd.f32 0.0, %v1381
        %v1383 = vpop.f32.mrf.mxu0
        %1384 = vmatprep.mubr.bf16.mxu0 0
        %1385 = vmatmul.mubr.bf16.gmra.mxu0 %v1078
        %v1386 = vpop.f32.mrf.mxu0
        %v1387 = vadd.f32 0.0, %v1386
        %v1388 = vpop.f32.mrf.mxu0
        %v1389 = vpop.f32.mrf.mxu0
        %v1390 = vadd.f32 0.0, %v1389
        %v1391 = vpop.f32.mrf.mxu0
        %1392 = vmatprep.mubr.bf16.mxu0 0
        %1393 = vmatmul.mubr.bf16.gmra.mxu0 %v1080
        %v1394 = vpop.f32.mrf.mxu0
        %v1395 = vadd.f32 0.0, %v1394
        %v1396 = vpop.f32.mrf.mxu0
        %v1397 = vpop.f32.mrf.mxu0
        %v1398 = vadd.f32 0.0, %v1397
        %v1399 = vpop.f32.mrf.mxu0
        %1400 = vmatprep.mubr.bf16.mxu0 0
        %1401 = vmatmul.mubr.bf16.gmra.mxu0 %v1082
        %v1402 = vpop.f32.mrf.mxu0
        %v1403 = vadd.f32 0.0, %v1402
        %v1404 = vpop.f32.mrf.mxu0
        %v1405 = vpop.f32.mrf.mxu0
        %v1406 = vadd.f32 0.0, %v1405
        %v1407 = vpop.f32.mrf.mxu0
        %1408 = vmatprep.mubr.bf16.mxu0 0
        %1409 = vmatmul.mubr.bf16.gmra.mxu0 %v1084
        %v1410 = vpop.f32.mrf.mxu0
        %v1411 = vadd.f32 0.0, %v1410
        %v1412 = vpop.f32.mrf.mxu0
        %v1413 = vpop.f32.mrf.mxu0
        %v1414 = vadd.f32 0.0, %v1413
        %v1415 = vpop.f32.mrf.mxu0
        %1416 = vmatprep.mubr.bf16.mxu0 0
        %1417 = vmatmul.mubr.bf16.gmra.mxu0 %v1086
        %v1418 = vpop.f32.mrf.mxu0
        %v1419 = vadd.f32 0.0, %v1418
        %v1420 = vpop.f32.mrf.mxu0
        %v1421 = vpop.f32.mrf.mxu0
        %v1422 = vadd.f32 0.0, %v1421
        %v1423 = vpop.f32.mrf.mxu0
        %1424 = vmatprep.mubr.bf16.mxu0 0
        %1425 = vmatmul.mubr.bf16.gmra.mxu0 %v1088
        %v1426 = vpop.f32.mrf.mxu0
        %v1427 = vadd.f32 0.0, %v1426
        %v1428 = vpop.f32.mrf.mxu0
        %v1429 = vpop.f32.mrf.mxu0
        %v1430 = vadd.f32 0.0, %v1429
        %v1431 = vpop.f32.mrf.mxu0
        %1432 = vmatprep.mubr.bf16.mxu0 0
        %1433 = vmatmul.mubr.bf16.gmra.mxu0 %v1090
        %v1434 = vpop.f32.mrf.mxu0
        %v1435 = vadd.f32 0.0, %v1434
        %v1436 = vpop.f32.mrf.mxu0
        %v1437 = vpop.f32.mrf.mxu0
        %v1438 = vadd.f32 0.0, %v1437
        %v1439 = vpop.f32.mrf.mxu0
        %1440 = vmatprep.mubr.bf16.mxu0 0
        %1441 = vmatmul.mubr.bf16.gmra.mxu0 %v1092
        %v1442 = vpop.f32.mrf.mxu0
        %v1443 = vadd.f32 0.0, %v1442
        %v1444 = vpop.f32.mrf.mxu0
        %v1445 = vpop.f32.mrf.mxu0
        %v1446 = vadd.f32 0.0, %v1445
        %v1447 = vpop.f32.mrf.mxu0
        %1448 = vmatprep.mubr.bf16.mxu0 0
        %1449 = vmatmul.mubr.bf16.gmra.mxu0 %v1094
        %v1450 = vpop.f32.mrf.mxu0
        %v1451 = vadd.f32 0.0, %v1450
        %v1452 = vpop.f32.mrf.mxu0
        %v1453 = vpop.f32.mrf.mxu0
        %v1454 = vadd.f32 0.0, %v1453
        %v1455 = vpop.f32.mrf.mxu0
        %1456 = vmatprep.mubr.bf16.mxu0 0
        %1457 = vmatmul.mubr.bf16.gmra.mxu0 %v1096
        %v1458 = vpop.f32.mrf.mxu0
        %v1459 = vadd.f32 0.0, %v1458
        %v1460 = vpop.f32.mrf.mxu0
        %v1461 = vpop.f32.mrf.mxu0
        %v1462 = vadd.f32 0.0, %v1461
        %v1463 = vpop.f32.mrf.mxu0
        %1464 = vmatprep.mubr.bf16.mxu0 0
        %1465 = vmatmul.mubr.bf16.gmra.mxu0 %v1098
        %v1466 = vpop.f32.mrf.mxu0
        %v1467 = vadd.f32 0.0, %v1466
        %v1468 = vpop.f32.mrf.mxu0
        %v1469 = vpop.f32.mrf.mxu0
        %v1470 = vadd.f32 0.0, %v1469
        %v1471 = vpop.f32.mrf.mxu0
        %1472 = vmatprep.mubr.bf16.mxu0 0
        %1473 = vmatmul.mubr.bf16.gmra.mxu0 %v1318
        %v1474 = vpop.f32.mrf.mxu0
        %v1475 = vadd.f32 0.0, %v1474
        %v1476 = vpop.f32.mrf.mxu0
        %v1477 = vpop.f32.mrf.mxu0
        %v1478 = vadd.f32 0.0, %v1477
        %v1479 = vpop.f32.mrf.mxu0
        %1480 = vdwg.mxu0
        %v1481 = vadd.f32 %v1261, %v1355
        %v1482 = vadd.f32 %v1262, %v1358
        %v1483 = vadd.f32 %v1263, %v1363
        %v1484 = vadd.f32 %v1264, %v1366
        %v1485 = vadd.f32 %v1265, %v1371
        %v1486 = vadd.f32 %v1266, %v1374
        %v1487 = vadd.f32 %v1267, %v1379
        %v1488 = vadd.f32 %v1268, %v1382
        %v1489 = vadd.f32 %v1269, %v1387
        %v1490 = vadd.f32 %v1270, %v1390
        %v1491 = vadd.f32 %v1271, %v1395
        %v1492 = vadd.f32 %v1272, %v1398
        %v1493 = vadd.f32 %v1273, %v1403
        %v1494 = vadd.f32 %v1274, %v1406
        %v1495 = vadd.f32 %v1275, %v1411
        %v1496 = vadd.f32 %v1276, %v1414
        %v1497 = vadd.f32 %v1277, %v1419
        %v1498 = vadd.f32 %v1278, %v1422
        %v1499 = vadd.f32 %v1279, %v1427
        %v1500 = vadd.f32 %v1280, %v1430
        %v1501 = vadd.f32 %v1281, %v1435
        %v1502 = vadd.f32 %v1282, %v1438
        %v1503 = vadd.f32 %v1283, %v1443
        %v1504 = vadd.f32 %v1284, %v1446
        %v1505 = vadd.f32 %v1285, %v1451
        %v1506 = vadd.f32 %v1286, %v1454
        %v1507 = vadd.f32 %v1287, %v1459
        %v1508 = vadd.f32 %v1288, %v1462
        %v1509 = vadd.f32 %v1289, %v1467
        %v1510 = vadd.f32 %v1290, %v1470
        %v1511 = vadd.f32 %v1291, %v1475
        %v1512 = vadd.f32 %v1292, %v1478
        %s1513 = scalar_lea.vmem %s3, 48
        %v1514 = vld [vmem:[%s1513] sm:$0xf]
        %v1515 = vld [vmem:[%s1513 + $0x4] sm:$0xf]
        %v1516 = vld [vmem:[%s1513 + $0x8] sm:$0xf]
        %v1517 = vld [vmem:[%s1513 + $0xc] sm:$0xf]
        %v1518 = vld [vmem:[%s1513 + $0x10] sm:$0xf]
        %v1519 = vld [vmem:[%s1513 + $0x14] sm:$0xf]
        %v1526 = vunpack.c.l.b16 %v1514
        %v1527 = vunpack.c.l.b16 %v1515
        %v1528 = vunpack.c.l.b16 %v1516
        %v1529 = vunpack.c.l.b16 %v1517
        %v1530 = vunpack.c.l.b16 %v1518
        %v1531 = vunpack.c.l.b16 %v1519
        %v1532 = vpack.c.b16 %v1527, %v1526
        %v1533 = vpack.c.b16 %v1529, %v1528
        %v1534 = vpack.c.b16 %v1531, %v1530
        %1538 = vmatprep.subr.bf16.mxu0 0
        %1539 = vmatpush1.bf16.msra.mxu0 0
        %1540 = vmatprep.subr.bf16.mxu0 0
        %1541 = vmatpush1.bf16.msra.mxu0 0
        %1542 = vmatprep.subr.bf16.mxu0 0
        %1543 = vmatpush1.bf16.msra.mxu0 0
        %1544 = vmatprep.subr.bf16.mxu0 0
        %1545 = vmatpush1.bf16.msra.mxu0 0
        %1546 = vmatprep.subr.bf16.mxu0 0
        %1547 = vmatpush1.bf16.msra.mxu0 0
        %1548 = vmatprep.subr.bf16.mxu0 0
        %1549 = vmatpush1.bf16.msra.mxu0 %v1534
        %1550 = vmatprep.subr.bf16.mxu0 0
        %1551 = vmatpush1.bf16.msra.mxu0 %v1533
        %1552 = vmatprep.subr.bf16.mxu0 0
        %1553 = vmatpush1.bf16.msra.mxu0 %v1532
        %1554 = vmatprep.subr.bf16.mxu0 0
        %1555 = vmatpush2.bf16.msra.mxu0 0
        %1556 = vmatprep.subr.bf16.mxu0 0
        %1557 = vmatpush2.bf16.msra.mxu0 0
        %1558 = vmatprep.subr.bf16.mxu0 0
        %1559 = vmatpush2.bf16.msra.mxu0 0
        %1560 = vmatprep.subr.bf16.mxu0 0
        %1561 = vmatpush2.bf16.msra.mxu0 0
        %1562 = vmatprep.subr.bf16.mxu0 0
        %1563 = vmatpush2.bf16.msra.mxu0 0
        %1564 = vmatprep.subr.bf16.mxu0 0
        %1565 = vmatpush2.bf16.msra.mxu0 0
        %1566 = vmatprep.subr.bf16.mxu0 0
        %1567 = vmatpush2.bf16.msra.mxu0 0
        %1568 = vmatprep.subr.bf16.mxu0 0
        %1569 = vmatpush2.bf16.msra.mxu0 0
        %1570 = vmatprep.mubr.bf16.mxu0 0
        %1571 = vmatmul.mubr.bf16.gmra.mxu0 %v1072
        %v1572 = vpop.f32.mrf.mxu0
        %v1573 = vadd.f32 0.0, %v1572
        %v1574 = vpop.f32.mrf.mxu0
        %v1575 = vpop.f32.mrf.mxu0
        %v1576 = vadd.f32 0.0, %v1575
        %v1577 = vpop.f32.mrf.mxu0
        %1578 = vmatprep.mubr.bf16.mxu0 0
        %1579 = vmatmul.mubr.bf16.gmra.mxu0 %v1074
        %v1580 = vpop.f32.mrf.mxu0
        %v1581 = vadd.f32 0.0, %v1580
        %v1582 = vpop.f32.mrf.mxu0
        %v1583 = vpop.f32.mrf.mxu0
        %v1584 = vadd.f32 0.0, %v1583
        %v1585 = vpop.f32.mrf.mxu0
        %1586 = vmatprep.mubr.bf16.mxu0 0
        %1587 = vmatmul.mubr.bf16.gmra.mxu0 %v1076
        %v1588 = vpop.f32.mrf.mxu0
        %v1589 = vadd.f32 0.0, %v1588
        %v1590 = vpop.f32.mrf.mxu0
        %v1591 = vpop.f32.mrf.mxu0
        %v1592 = vadd.f32 0.0, %v1591
        %v1593 = vpop.f32.mrf.mxu0
        %1594 = vmatprep.mubr.bf16.mxu0 0
        %1595 = vmatmul.mubr.bf16.gmra.mxu0 %v1078
        %v1596 = vpop.f32.mrf.mxu0
        %v1597 = vadd.f32 0.0, %v1596
        %v1598 = vpop.f32.mrf.mxu0
        %v1599 = vpop.f32.mrf.mxu0
        %v1600 = vadd.f32 0.0, %v1599
        %v1601 = vpop.f32.mrf.mxu0
        %1602 = vmatprep.mubr.bf16.mxu0 0
        %1603 = vmatmul.mubr.bf16.gmra.mxu0 %v1080
        %v1604 = vpop.f32.mrf.mxu0
        %v1605 = vadd.f32 0.0, %v1604
        %v1606 = vpop.f32.mrf.mxu0
        %v1607 = vpop.f32.mrf.mxu0
        %v1608 = vadd.f32 0.0, %v1607
        %v1609 = vpop.f32.mrf.mxu0
        %1610 = vmatprep.mubr.bf16.mxu0 0
        %1611 = vmatmul.mubr.bf16.gmra.mxu0 %v1082
        %v1612 = vpop.f32.mrf.mxu0
        %v1613 = vadd.f32 0.0, %v1612
        %v1614 = vpop.f32.mrf.mxu0
        %v1615 = vpop.f32.mrf.mxu0
        %v1616 = vadd.f32 0.0, %v1615
        %v1617 = vpop.f32.mrf.mxu0
        %1618 = vmatprep.mubr.bf16.mxu0 0
        %1619 = vmatmul.mubr.bf16.gmra.mxu0 %v1084
        %v1620 = vpop.f32.mrf.mxu0
        %v1621 = vadd.f32 0.0, %v1620
        %v1622 = vpop.f32.mrf.mxu0
        %v1623 = vpop.f32.mrf.mxu0
        %v1624 = vadd.f32 0.0, %v1623
        %v1625 = vpop.f32.mrf.mxu0
        %1626 = vmatprep.mubr.bf16.mxu0 0
        %1627 = vmatmul.mubr.bf16.gmra.mxu0 %v1086
        %v1628 = vpop.f32.mrf.mxu0
        %v1629 = vadd.f32 0.0, %v1628
        %v1630 = vpop.f32.mrf.mxu0
        %v1631 = vpop.f32.mrf.mxu0
        %v1632 = vadd.f32 0.0, %v1631
        %v1633 = vpop.f32.mrf.mxu0
        %1634 = vmatprep.mubr.bf16.mxu0 0
        %1635 = vmatmul.mubr.bf16.gmra.mxu0 %v1088
        %v1636 = vpop.f32.mrf.mxu0
        %v1637 = vadd.f32 0.0, %v1636
        %v1638 = vpop.f32.mrf.mxu0
        %v1639 = vpop.f32.mrf.mxu0
        %v1640 = vadd.f32 0.0, %v1639
        %v1641 = vpop.f32.mrf.mxu0
        %1642 = vmatprep.mubr.bf16.mxu0 0
        %1643 = vmatmul.mubr.bf16.gmra.mxu0 %v1090
        %v1644 = vpop.f32.mrf.mxu0
        %v1645 = vadd.f32 0.0, %v1644
        %v1646 = vpop.f32.mrf.mxu0
        %v1647 = vpop.f32.mrf.mxu0
        %v1648 = vadd.f32 0.0, %v1647
        %v1649 = vpop.f32.mrf.mxu0
        %1650 = vmatprep.mubr.bf16.mxu0 0
        %1651 = vmatmul.mubr.bf16.gmra.mxu0 %v1092
        %v1652 = vpop.f32.mrf.mxu0
        %v1653 = vadd.f32 0.0, %v1652
        %v1654 = vpop.f32.mrf.mxu0
        %v1655 = vpop.f32.mrf.mxu0
        %v1656 = vadd.f32 0.0, %v1655
        %v1657 = vpop.f32.mrf.mxu0
        %1658 = vmatprep.mubr.bf16.mxu0 0
        %1659 = vmatmul.mubr.bf16.gmra.mxu0 %v1094
        %v1660 = vpop.f32.mrf.mxu0
        %v1661 = vadd.f32 0.0, %v1660
        %v1662 = vpop.f32.mrf.mxu0
        %v1663 = vpop.f32.mrf.mxu0
        %v1664 = vadd.f32 0.0, %v1663
        %v1665 = vpop.f32.mrf.mxu0
        %1666 = vmatprep.mubr.bf16.mxu0 0
        %1667 = vmatmul.mubr.bf16.gmra.mxu0 %v1096
        %v1668 = vpop.f32.mrf.mxu0
        %v1669 = vadd.f32 0.0, %v1668
        %v1670 = vpop.f32.mrf.mxu0
        %v1671 = vpop.f32.mrf.mxu0
        %v1672 = vadd.f32 0.0, %v1671
        %v1673 = vpop.f32.mrf.mxu0
        %1674 = vmatprep.mubr.bf16.mxu0 0
        %1675 = vmatmul.mubr.bf16.gmra.mxu0 %v1098
        %v1676 = vpop.f32.mrf.mxu0
        %v1677 = vadd.f32 0.0, %v1676
        %v1678 = vpop.f32.mrf.mxu0
        %v1679 = vpop.f32.mrf.mxu0
        %v1680 = vadd.f32 0.0, %v1679
        %v1681 = vpop.f32.mrf.mxu0
        %1682 = vmatprep.mubr.bf16.mxu0 0
        %1683 = vmatmul.mubr.bf16.gmra.mxu0 %v1318
        %v1684 = vpop.f32.mrf.mxu0
        %v1685 = vadd.f32 0.0, %v1684
        %v1686 = vpop.f32.mrf.mxu0
        %v1687 = vpop.f32.mrf.mxu0
        %v1688 = vadd.f32 0.0, %v1687
        %v1689 = vpop.f32.mrf.mxu0
        %1690 = vmatprep.mubr.bf16.mxu0 0
        %1691 = vmatmul.mubr.bf16.gmra.mxu0 %v1068
        %v1692 = vpop.f32.mrf.mxu0
        %v1693 = vadd.f32 0.0, %v1692
        %v1694 = vpop.f32.mrf.mxu0
        %v1695 = vpop.f32.mrf.mxu0
        %v1696 = vadd.f32 0.0, %v1695
        %v1697 = vpop.f32.mrf.mxu0
        %1698 = vdwg.mxu0
        %v1699 = vadd.f32 %v1481, %v1573
        %v1700 = vadd.f32 %v1482, %v1576
        %v1701 = vadd.f32 %v1483, %v1581
        %v1702 = vadd.f32 %v1484, %v1584
        %v1703 = vadd.f32 %v1485, %v1589
        %v1704 = vadd.f32 %v1486, %v1592
        %v1705 = vadd.f32 %v1487, %v1597
        %v1706 = vadd.f32 %v1488, %v1600
        %v1707 = vadd.f32 %v1489, %v1605
        %v1708 = vadd.f32 %v1490, %v1608
        %v1709 = vadd.f32 %v1491, %v1613
        %v1710 = vadd.f32 %v1492, %v1616
        %v1711 = vadd.f32 %v1493, %v1621
        %v1712 = vadd.f32 %v1494, %v1624
        %v1713 = vadd.f32 %v1495, %v1629
        %v1714 = vadd.f32 %v1496, %v1632
        %v1715 = vadd.f32 %v1497, %v1637
        %v1716 = vadd.f32 %v1498, %v1640
        %v1717 = vadd.f32 %v1499, %v1645
        %v1718 = vadd.f32 %v1500, %v1648
        %v1719 = vadd.f32 %v1501, %v1653
        %v1720 = vadd.f32 %v1502, %v1656
        %v1721 = vadd.f32 %v1503, %v1661
        %v1722 = vadd.f32 %v1504, %v1664
        %v1723 = vadd.f32 %v1505, %v1669
        %v1724 = vadd.f32 %v1506, %v1672
        %v1725 = vadd.f32 %v1507, %v1677
        %v1726 = vadd.f32 %v1508, %v1680
        %v1727 = vadd.f32 %v1509, %v1685
        %v1728 = vadd.f32 %v1510, %v1688
        %v1729 = vadd.f32 %v1511, %v1693
        %v1730 = vadd.f32 %v1512, %v1696
        %1763 = vrot.lane.b32.xlu0 %v1699, 8
        %v1764 = vpop.permute.xlu0 %1763
        %1765 = vrot.lane.b32.xlu0 %v1700, 8
        %v1766 = vpop.permute.xlu0 %1765
        %1767 = vrot.lane.b32.xlu0 %v1701, 8
        %v1768 = vpop.permute.xlu0 %1767
        %1769 = vrot.lane.b32.xlu0 %v1702, 8
        %v1770 = vpop.permute.xlu0 %1769
        %1771 = vrot.lane.b32.xlu0 %v1703, 8
        %v1772 = vpop.permute.xlu0 %1771
        %1773 = vrot.lane.b32.xlu0 %v1704, 8
        %v1774 = vpop.permute.xlu0 %1773
        %1775 = vrot.lane.b32.xlu0 %v1705, 8
        %v1776 = vpop.permute.xlu0 %1775
        %1777 = vrot.lane.b32.xlu0 %v1706, 8
        %v1778 = vpop.permute.xlu0 %1777
        %1779 = vrot.lane.b32.xlu0 %v1707, 8
        %v1780 = vpop.permute.xlu0 %1779
        %1781 = vrot.lane.b32.xlu0 %v1708, 8
        %v1782 = vpop.permute.xlu0 %1781
        %1783 = vrot.lane.b32.xlu0 %v1709, 8
        %v1784 = vpop.permute.xlu0 %1783
        %1785 = vrot.lane.b32.xlu0 %v1710, 8
        %v1786 = vpop.permute.xlu0 %1785
        %1787 = vrot.lane.b32.xlu0 %v1711, 8
        %v1788 = vpop.permute.xlu0 %1787
        %1789 = vrot.lane.b32.xlu0 %v1712, 8
        %v1790 = vpop.permute.xlu0 %1789
        %1791 = vrot.lane.b32.xlu0 %v1713, 8
        %v1792 = vpop.permute.xlu0 %1791
        %1793 = vrot.lane.b32.xlu0 %v1714, 8
        %v1794 = vpop.permute.xlu0 %1793
        %1795 = vrot.lane.b32.xlu0 %v1715, 8
        %v1796 = vpop.permute.xlu0 %1795
        %1797 = vrot.lane.b32.xlu0 %v1716, 8
        %v1798 = vpop.permute.xlu0 %1797
        %1799 = vrot.lane.b32.xlu0 %v1717, 8
        %v1800 = vpop.permute.xlu0 %1799
        %1801 = vrot.lane.b32.xlu0 %v1718, 8
        %v1802 = vpop.permute.xlu0 %1801
        %1803 = vrot.lane.b32.xlu0 %v1719, 8
        %v1804 = vpop.permute.xlu0 %1803
        %1805 = vrot.lane.b32.xlu0 %v1720, 8
        %v1806 = vpop.permute.xlu0 %1805
        %1807 = vrot.lane.b32.xlu0 %v1721, 8
        %v1808 = vpop.permute.xlu0 %1807
        %1809 = vrot.lane.b32.xlu0 %v1722, 8
        %v1810 = vpop.permute.xlu0 %1809
        %1811 = vrot.lane.b32.xlu0 %v1723, 8
        %v1812 = vpop.permute.xlu0 %1811
        %1813 = vrot.lane.b32.xlu0 %v1724, 8
        %v1814 = vpop.permute.xlu0 %1813
        %1815 = vrot.lane.b32.xlu0 %v1725, 8
        %v1816 = vpop.permute.xlu0 %1815
        %1817 = vrot.lane.b32.xlu0 %v1726, 8
        %v1818 = vpop.permute.xlu0 %1817
        %1819 = vrot.lane.b32.xlu0 %v1727, 8
        %v1820 = vpop.permute.xlu0 %1819
        %1821 = vrot.lane.b32.xlu0 %v1728, 8
        %v1822 = vpop.permute.xlu0 %1821
        %1823 = vrot.lane.b32.xlu0 %v1729, 8
        %v1824 = vpop.permute.xlu0 %1823
        %1825 = vrot.lane.b32.xlu0 %v1730, 8
        %v1826 = vpop.permute.xlu0 %1825
        %vm1859 = vcmask 64512
        %v1860 = vsel %vm1859, 0.0, %v1764
        %v1861 = vsel %vm1859, 0.0, %v1766
        %v1862 = vsel %vm1859, 0.0, %v1768
        %v1863 = vsel %vm1859, 0.0, %v1770
        %v1864 = vsel %vm1859, 0.0, %v1772
        %v1865 = vsel %vm1859, 0.0, %v1774
        %v1866 = vsel %vm1859, 0.0, %v1776
        %v1867 = vsel %vm1859, 0.0, %v1778
        %v1868 = vsel %vm1859, 0.0, %v1780
        %v1869 = vsel %vm1859, 0.0, %v1782
        %v1870 = vsel %vm1859, 0.0, %v1784
        %v1871 = vsel %vm1859, 0.0, %v1786
        %v1872 = vsel %vm1859, 0.0, %v1788
        %v1873 = vsel %vm1859, 0.0, %v1790
        %v1874 = vsel %vm1859, 0.0, %v1792
        %v1875 = vsel %vm1859, 0.0, %v1794
        %v1876 = vsel %vm1859, 0.0, %v1796
        %v1877 = vsel %vm1859, 0.0, %v1798
        %v1878 = vsel %vm1859, 0.0, %v1800
        %v1879 = vsel %vm1859, 0.0, %v1802
        %v1880 = vsel %vm1859, 0.0, %v1804
        %v1881 = vsel %vm1859, 0.0, %v1806
        %v1882 = vsel %vm1859, 0.0, %v1808
        %v1883 = vsel %vm1859, 0.0, %v1810
        %v1884 = vsel %vm1859, 0.0, %v1812
        %v1885 = vsel %vm1859, 0.0, %v1814
        %v1886 = vsel %vm1859, 0.0, %v1816
        %v1887 = vsel %vm1859, 0.0, %v1818
        %v1888 = vsel %vm1859, 0.0, %v1820
        %v1889 = vsel %vm1859, 0.0, %v1822
        %v1890 = vsel %vm1859, 0.0, %v1824
        %v1891 = vsel %vm1859, 0.0, %v1826
        %v1892 = vadd.f32 %v244, %v1860
        %v1893 = vadd.f32 %v245, %v1861
        %v1894 = vadd.f32 %v246, %v1862
        %v1895 = vadd.f32 %v247, %v1863
        %v1896 = vadd.f32 %v248, %v1864
        %v1897 = vadd.f32 %v249, %v1865
        %v1898 = vadd.f32 %v250, %v1866
        %v1899 = vadd.f32 %v251, %v1867
        %v1900 = vadd.f32 %v252, %v1868
        %v1901 = vadd.f32 %v253, %v1869
        %v1902 = vadd.f32 %v254, %v1870
        %v1903 = vadd.f32 %v255, %v1871
        %v1904 = vadd.f32 %v256, %v1872
        %v1905 = vadd.f32 %v257, %v1873
        %v1906 = vadd.f32 %v258, %v1874
        %v1907 = vadd.f32 %v259, %v1875
        %v1908 = vadd.f32 %v260, %v1876
        %v1909 = vadd.f32 %v261, %v1877
        %v1910 = vadd.f32 %v262, %v1878
        %v1911 = vadd.f32 %v263, %v1879
        %v1912 = vadd.f32 %v264, %v1880
        %v1913 = vadd.f32 %v265, %v1881
        %v1914 = vadd.f32 %v266, %v1882
        %v1915 = vadd.f32 %v267, %v1883
        %v1916 = vadd.f32 %v268, %v1884
        %v1917 = vadd.f32 %v269, %v1885
        %v1918 = vadd.f32 %v270, %v1886
        %v1919 = vadd.f32 %v271, %v1887
        %v1920 = vadd.f32 %v272, %v1888
        %v1921 = vadd.f32 %v273, %v1889
        %v1922 = vadd.f32 %v274, %v1890
        %v1923 = vadd.f32 %v275, %v1891
        %1924 = vst.msk [vmem:[%s242] sm:$0xff] %vm966, %v1892
        %1925 = vst.msk [vmem:[%s242 + $0x8] sm:$0xff] %vm966, %v1893
        %1926 = vst.msk [vmem:[%s242 + $0x10] sm:$0xff] %vm966, %v1894
        %1927 = vst.msk [vmem:[%s242 + $0x18] sm:$0xff] %vm966, %v1895
        %1928 = vst.msk [vmem:[%s242 + $0x20] sm:$0xff] %vm966, %v1896
        %1929 = vst.msk [vmem:[%s242 + $0x28] sm:$0xff] %vm966, %v1897
        %1930 = vst.msk [vmem:[%s242 + $0x30] sm:$0xff] %vm966, %v1898
        %1931 = vst.msk [vmem:[%s242 + $0x38] sm:$0xff] %vm966, %v1899
        %1932 = vst.msk [vmem:[%s242 + $0x40] sm:$0xff] %vm966, %v1900
        %1933 = vst.msk [vmem:[%s242 + $0x48] sm:$0xff] %vm966, %v1901
        %1934 = vst.msk [vmem:[%s242 + $0x50] sm:$0xff] %vm966, %v1902
        %1935 = vst.msk [vmem:[%s242 + $0x58] sm:$0xff] %vm966, %v1903
        %1936 = vst.msk [vmem:[%s242 + $0x60] sm:$0xff] %vm966, %v1904
        %1937 = vst.msk [vmem:[%s242 + $0x68] sm:$0xff] %vm966, %v1905
        %1938 = vst.msk [vmem:[%s242 + $0x70] sm:$0xff] %vm966, %v1906
        %1939 = vst.msk [vmem:[%s242 + $0x78] sm:$0xff] %vm966, %v1907
        %1940 = vst.msk [vmem:[%s242 + $0x80] sm:$0xff] %vm966, %v1908
        %1941 = vst.msk [vmem:[%s242 + $0x88] sm:$0xff] %vm966, %v1909
        %1942 = vst.msk [vmem:[%s242 + $0x90] sm:$0xff] %vm966, %v1910
        %1943 = vst.msk [vmem:[%s242 + $0x98] sm:$0xff] %vm966, %v1911
        %1944 = vst.msk [vmem:[%s242 + $0xa0] sm:$0xff] %vm966, %v1912
        %1945 = vst.msk [vmem:[%s242 + $0xa8] sm:$0xff] %vm966, %v1913
        %1946 = vst.msk [vmem:[%s242 + $0xb0] sm:$0xff] %vm966, %v1914
        %1947 = vst.msk [vmem:[%s242 + $0xb8] sm:$0xff] %vm966, %v1915
        %1948 = vst.msk [vmem:[%s242 + $0xc0] sm:$0xff] %vm966, %v1916
        %1949 = vst.msk [vmem:[%s242 + $0xc8] sm:$0xff] %vm966, %v1917
        %1950 = vst.msk [vmem:[%s242 + $0xd0] sm:$0xff] %vm966, %v1918
        %1951 = vst.msk [vmem:[%s242 + $0xd8] sm:$0xff] %vm966, %v1919
        %1952 = vst.msk [vmem:[%s242 + $0xe0] sm:$0xff] %vm966, %v1920
        %1953 = vst.msk [vmem:[%s242 + $0xe8] sm:$0xff] %vm966, %v1921
        %1954 = vst.msk [vmem:[%s242 + $0xf0] sm:$0xff] %vm966, %v1922
        %1955 = vst.msk [vmem:[%s242 + $0xf8] sm:$0xff] %vm966, %v1923
        %s1956 = sand.u32 %s140, 1
        %s1957 = scalar_lea.sflag [#allocation4], %s1956
        %s1958 = sand.u32 %s140, 1
        %s1959 = smul.addr %s1958, 256
        %s1960 = scalar_lea.vmem [#allocation5], %s1959
        // Predicated region
        $region45: #{tpu_custom_call.1} parent=39 // pred_check
          %p1961 = pneg %p150
        $region46: #{tpu_custom_call.1} parent=39 // pred_check_branch
          %1963 = sbr.rel (%p1961) target = $region48
        $region47: #{tpu_custom_call.1} parent=39 // pred_region
          %s1965 = ssub.s32 4096, 4096
          %1966 = vsyncadd %s1957, %s1965
          %s1967 = smul.addr %s22, 32
          %s1968 = smul.addr %s1967, 128
          %s1969 = scalar_lea.hbm %s5, %s1968
          %s1970 = sshll.u32 %s1960, 4
          %s1971 = int_to_ptr.vmem [resolvable:$true] %s1970
          %1976 = dma.vmem_to_hbm [thread:$0]  %s1971, 4096, %s1969, %s1957, 128, 128, 8
        $region48: #{tpu_custom_call.1} parent=39 // pred_fallthru
          _
      $region40: #{tpu_custom_call.1} parent=5 // pred_fallthru
        _
      %p1977 = scmp.le.s32.totalorder 2, %s17
      // Predicated region
      $region49: #{tpu_custom_call.1} parent=5 // pred_check
        %p1978 = pneg %p1977
      $region50: #{tpu_custom_call.1} parent=5 // pred_check_branch
        %1980 = sbr.rel (%p1978) target = $region52
      $region51: #{tpu_custom_call.1} parent=5 // pred_region
        %s1981 = ssub.s32 %s17, 2
        // Predicated region
        $region53: #{tpu_custom_call.1} parent=51 // pred_check
          %p1982 = pneg %p156
        $region54: #{tpu_custom_call.1} parent=51 // pred_check_branch
          %1984 = sbr.rel (%p1982) target = $region56
        $region55: #{tpu_custom_call.1} parent=51 // pred_region
          %s1985 = sand.u32 %s141, 1
          %s1986 = scalar_lea.sflag [#allocation4], %s1985
          %s1987 = sand.u32 %s141, 1
          %s1988 = smul.addr %s1987, 256
          %s1989 = scalar_lea.vmem [#allocation5], %s1988
          %1990 = dma.done %s1986, 4096
        $region56: #{tpu_custom_call.1} parent=51 // pred_fallthru
          _
      $region52: #{tpu_custom_call.1} parent=5 // pred_fallthru
        _
    $region6: #{tpu_custom_call.1} parent=1 // loop_footer
      %s21 = sadd.s32 1, %s17
    $region7: #{tpu_custom_call.1} parent=1 // loop_footer_branch
      %16 = sbr.rel target = $region3
    $region8: #{tpu_custom_call.1} parent=1 // loop_exit
      _
    %1991 = vsyncpa [#allocation3], 1
    %s1992 = scalar_lea.sflag [#allocation3], 1
    %1993 = vsyncpa %s1992, 1
    %1994 = vsyncpa [#allocation4], 1
    %s1995 = scalar_lea.sflag [#allocation4], 1
    %1996 = vsyncpa %s1995, 1

</llo_original>
